<compile_context>
chip_gen: v7x
topology: tpu7x:2x2x1
jax: 0.10.0
libtpu: 0.0.40
codegen_flags: <defaults>
</compile_context>

<pallas_src>
import functools

import jax
import jax.numpy as jnp
from jax import lax
from jax.experimental import pallas as pl
from jax.experimental.pallas import tpu as pltpu


def _round_up(x, m):
    return (x + m - 1) // m * m


# ---------------------------------------------------------------------------
# Kernel.
# ---------------------------------------------------------------------------
def _spatial_attention_kernel(x_ref, w_ref, o_ref,
                              sum_ref, max_ref, pad_a_ref, pad_m_ref, *,
                              C, c_blk, H, W, K, needs_mask):
    P = K // 2
    KK = K * K
    cb = pl.program_id(1)
    n_cb = pl.num_programs(1)

    # ---- lane-dense partial channel reduction on the flat (c_blk, H*W) block ----
    xb = x_ref[0]                                            # (c_blk, HW), input dtype
    if needs_mask:
        # Tail block of a non-divisible C: mask the out-of-range channel rows.
        ch = cb * c_blk + lax.broadcasted_iota(jnp.int32, (c_blk, 1), 0)
        valid = ch < C
        xs = jnp.where(valid, xb, jnp.zeros((), xb.dtype))
        xm = jnp.where(valid, xb, jnp.full((), -jnp.inf, xb.dtype))
    else:
        xs = xb
        xm = xb
    part_sum = jnp.sum(xs, axis=0, keepdims=True, dtype=jnp.float32)    # (1, HW) f32
    part_max = jnp.max(xm, axis=0, keepdims=True).astype(jnp.float32)   # (1, HW) f32

    @pl.when(cb == 0)
    def _init():
        sum_ref[...] = part_sum
        max_ref[...] = part_max

    @pl.when(cb > 0)
    def _accumulate():
        sum_ref[...] = sum_ref[...] + part_sum
        max_ref[...] = jnp.maximum(max_ref[...], part_max)

    @pl.when(cb == n_cb - 1)
    def _conv_and_store():
        # Zero-padded 2D planes; the borders are exactly the conv's "same" padding.
        pad_a_ref[...] = jnp.zeros(pad_a_ref.shape, jnp.float32)
        pad_m_ref[...] = jnp.zeros(pad_m_ref.shape, jnp.float32)
        # Scatter the H rows of the flat accumulators into the plane interiors
        # (static slices; once per image).
        for h in range(H):
            pad_a_ref[pl.ds(P + h, 1), pl.ds(P, W)] = sum_ref[:, pl.ds(h * W, W)]
            pad_m_ref[pl.ds(P + h, 1), pl.ds(P, W)] = max_ref[:, pl.ds(h * W, W)]

        # 7x7 conv over [avg, max]: fully unrolled static taps, 4 partial
        # accumulators break the serial VALU add chain.  The 1/C of the mean is
        # folded into the avg-channel weights on the host.
        accs = [jnp.zeros((H, W), jnp.float32) for _ in range(4)]
        i = 0
        for kh in range(K):
            for kw in range(K):
                w_a = w_ref[kh * K + kw]            # avg-channel weight (pre-scaled 1/C)
                w_m = w_ref[KK + kh * K + kw]       # max-channel weight
                a_tap = pad_a_ref[pl.ds(kh, H), pl.ds(kw, W)]
                m_tap = pad_m_ref[pl.ds(kh, H), pl.ds(kw, W)]
                accs[i % 4] = accs[i % 4] + w_a * a_tap
                accs[(i + 1) % 4] = accs[(i + 1) % 4] + w_m * m_tap
                i += 2
        conv = (accs[0] + accs[1]) + (accs[2] + accs[3])
        o_ref[0, 0] = jax.nn.sigmoid(conv).astype(o_ref.dtype)


# ---------------------------------------------------------------------------
# Wrapper.
# ---------------------------------------------------------------------------
def _pick_channel_block(C, HW, itemsize, budget_bytes=24 * 1024 * 1024):
    """Largest channel block whose double-buffered (1, c_blk, HW) tile fits budget."""
    lane_hw = _round_up(HW, 128)
    per_chan = 2 * lane_hw * max(int(itemsize), 1)       # double-buffered bytes / channel
    max_ch = max(1, budget_bytes // per_chan)
    if C <= max_ch:
        return int(C)                                    # single block; c_blk == C is legal
    return int(max(8, (max_ch // 8) * 8))                # blocked: multiple of 8, tail masked


def spatial_attention(x, weight, kernel_size=7):
    """x: (N, C, H, W), weight: (1, 2, K, K) -> sigmoid(conv([mean_c, max_c])) (N,1,H,W)."""
    assert kernel_size in (3, 7), "kernel size must be 3 or 7"
    N, C, H, W = x.shape
    K = kernel_size
    P = K // 2
    assert weight.shape == (1, 2, K, K)
    HW = H * W

    # Free metadata reshape of contiguous NCHW -> flat lane-dense layout.
    x_flat = x.reshape(N, C, HW)

    # Fold 1/C of the channel mean into the avg-channel weights; flatten so the
    # 2*K*K weights live as scalars in SMEM.
    w32 = weight.astype(jnp.float32)
    w_flat = jnp.concatenate(
        [(w32[0, 0] / float(C)).reshape(-1), w32[0, 1].reshape(-1)])

    itemsize = int(x.dtype.itemsize)
    c_blk = _pick_channel_block(C, HW, itemsize)
    n_cb = pl.cdiv(C, c_blk)
    needs_mask = (C % c_blk) != 0

    kernel = functools.partial(
        _spatial_attention_kernel,
        C=C, c_blk=c_blk, H=H, W=W, K=K, needs_mask=needs_mask)

    # Exact-ish VMEM accounting with headroom; cap keeps it legal on v7x (64 MiB/TC)
    # while still raising the default scoped limit on v5e/v6e.
    HWl = _round_up(HW, 128)
    est = (2 * _round_up(c_blk, 8) * HWl * itemsize                 # input block x2 bufs
           + 2 * _round_up(H, 8) * _round_up(W, 128) * itemsize     # output block x2 bufs
           + 2 * 8 * HWl * 4                                        # flat sum/max scratch
           + 2 * _round_up(H + 2 * P, 8) * _round_up(W + 2 * P, 128) * 4)  # conv pads
    vmem_limit = int(min(40 * 1024 * 1024,
                         max(16 * 1024 * 1024, int(est * 1.5) + (2 << 20))))

    cost = pl.CostEstimate(
        flops=int(N * (2 * C * HW + 4 * K * K * HW)),
        transcendentals=int(N * HW),
        bytes_accessed=int(x.size * itemsize + w_flat.size * 4 + N * HW * itemsize),
    )

    out = pl.pallas_call(
        kernel,
        out_shape=jax.ShapeDtypeStruct((N, 1, H, W), x.dtype),
        grid_spec=pltpu.PrefetchScalarGridSpec(
            num_scalar_prefetch=0,
            grid=(N, n_cb),
            in_specs=[
                pl.BlockSpec((1, c_blk, HW), lambda n, cb: (n, cb, 0)),
                pl.BlockSpec(memory_space=pltpu.MemorySpace.SMEM),
            ],
            out_specs=pl.BlockSpec((1, 1, H, W), lambda n, cb: (n, 0, 0, 0)),
            scratch_shapes=[
                pltpu.VMEM((1, HW), jnp.float32),                     # running channel-sum
                pltpu.VMEM((1, HW), jnp.float32),                     # running channel-max
                pltpu.VMEM((H + 2 * P, W + 2 * P), jnp.float32),      # zero-padded avg plane
                pltpu.VMEM((H + 2 * P, W + 2 * P), jnp.float32),      # zero-padded max plane
            ],
        ),
        compiler_params=pltpu.CompilerParams(
            dimension_semantics=("parallel", "arbitrary"),
            vmem_limit_bytes=vmem_limit,
        ),
        cost_estimate=cost,
    )(x_flat, w_flat)

    return out


# ---------------------------------------------------------------------------
# Pure-JAX reference (matches PyTorch semantics) for validation.
# ---------------------------------------------------------------------------
def spatial_attention_ref(x, weight, kernel_size=7):
    P = kernel_size // 2
    avg = jnp.mean(x, axis=1, keepdims=True)
    mx = jnp.max(x, axis=1, keepdims=True)
    feat = jnp.concatenate([avg, mx], axis=1)                 # (N, 2, H, W)
    y = lax.conv_general_dilated(
        feat, weight, window_strides=(1, 1),
        padding=[(P, P), (P, P)],
        dimension_numbers=("NCHW", "OIHW", "NCHW"),
        precision=lax.Precision.HIGHEST)
    return jax.nn.sigmoid(y)


if __name__ == "__main__":
    key = jax.random.PRNGKey(0)
    kx, kw_key = jax.random.split(key)

    N, C, H, W = 2, 4, 16, 16
    K = 7

    x = jax.random.normal(kx, (N, C, H, W), dtype=jnp.float32)
    # Conv2d(2, 1, 7, bias=False) weight, kaiming-uniform-ish scale.
    fan_in = 2 * K * K
    bound = (1.0 / fan_in) ** 0.5
    weight = jax.random.uniform(kw_key, (1, 2, K, K), dtype=jnp.float32,
                                minval=-bound, maxval=bound)

    out = spatial_attention(x, weight, kernel_size=K)
    out = jax.block_until_ready(out)

    ref = spatial_attention_ref(x, weight, kernel_size=K)
    assert out.shape == (N, 1, H, W)
    err = float(jnp.max(jnp.abs(out - ref)))
    assert err < 1e-4, f"max abs err {err}"

    print("KERNEL_OK")
</pallas_src>

<mosaic_0001>
module attributes {stable_mosaic.version = 11 : i64} {
  func.func @_spatial_attention_kernel(%arg0: i32, %arg1: i32, %arg2: memref<1x4x256xf32, #tpu.memory_space<vmem>>, %arg3: memref<98xf32, #tpu.memory_space<smem>>, %arg4: memref<1x1x16x16xf32, #tpu.memory_space<vmem>>, %arg5: memref<1x256xf32, #tpu.memory_space<vmem>>, %arg6: memref<1x256xf32, #tpu.memory_space<vmem>>, %arg7: memref<22x22xf32, #tpu.memory_space<vmem>>, %arg8: memref<22x22xf32, #tpu.memory_space<vmem>>) attributes {dimension_semantics = [#tpu.dimension_semantics<parallel>, #tpu.dimension_semantics<arbitrary>], iteration_bounds = array<i64: 2, 1>, scalar_prefetch = 0 : i64, scratch_operands = 4 : i64, tpu.core_type = #tpu.core_type<tc>, window_params = [{transform_indices = @transform_0, window_bounds = array<i64: 1, 4, 256>}, {transform_indices = @transform_1, window_bounds = array<i64: 98>}, {transform_indices = @transform_2, window_bounds = array<i64: 1, 1, 16, 16>}]} {
    %c0 = arith.constant 0 : index
    %c0_0 = arith.constant 0 : index
    %c0_1 = arith.constant 0 : index
    %0 = vector.load %arg2[%c0, %c0_0, %c0_1] : memref<1x4x256xf32, #tpu.memory_space<vmem>>, vector<1x4x256xf32>
    %1 = vector.shape_cast %0 : vector<1x4x256xf32> to vector<4x256xf32>
    %cst = arith.constant dense<0.000000e+00> : vector<256xf32>
    %2 = vector.multi_reduction <add>, %1, %cst [0] : vector<4x256xf32> to vector<256xf32>
    %3 = vector.shape_cast %2 : vector<256xf32> to vector<1x256xf32>
    %cst_2 = arith.constant dense<0xFF800000> : vector<256xf32>
    %4 = vector.multi_reduction <maximumf>, %1, %cst_2 [0] : vector<4x256xf32> to vector<256xf32>
    %5 = vector.shape_cast %4 : vector<256xf32> to vector<1x256xf32>
    %c0_i32 = arith.constant 0 : i32
    %6 = arith.cmpi eq, %arg1, %c0_i32 : i32
    %7 = arith.extui %6 : i1 to i32
    %c0_i32_3 = arith.constant 0 : i32
    %8 = arith.cmpi ne, %7, %c0_i32_3 : i32
    scf.if %8 {
      %c0_8 = arith.constant 0 : index
      %c0_9 = arith.constant 0 : index
      %15 = vector.load %arg5[%c0_8, %c0_9] : memref<1x256xf32, #tpu.memory_space<vmem>>, vector<1x256xf32>
      tpu.vector_store %arg5[%c0_8, %c0_9], %3 {strides = array<i32>} : memref<1x256xf32, #tpu.memory_space<vmem>>, vector<1x256xf32>,
      %c0_10 = arith.constant 0 : index
      %c0_11 = arith.constant 0 : index
      %16 = vector.load %arg6[%c0_10, %c0_11] : memref<1x256xf32, #tpu.memory_space<vmem>>, vector<1x256xf32>
      tpu.vector_store %arg6[%c0_10, %c0_11], %5 {strides = array<i32>} : memref<1x256xf32, #tpu.memory_space<vmem>>, vector<1x256xf32>,
    } else {
    }
    %c0_i32_4 = arith.constant 0 : i32
    %9 = arith.cmpi sgt, %arg1, %c0_i32_4 : i32
    %10 = arith.extui %9 : i1 to i32
    %c0_i32_5 = arith.constant 0 : i32
    %11 = arith.cmpi ne, %10, %c0_i32_5 : i32
    scf.if %11 {
      %c0_8 = arith.constant 0 : index
      %c0_9 = arith.constant 0 : index
      %15 = vector.load %arg5[%c0_8, %c0_9] : memref<1x256xf32, #tpu.memory_space<vmem>>, vector<1x256xf32>
      %16 = arith.addf %15, %3 : vector<1x256xf32>
      %c0_10 = arith.constant 0 : index
      %c0_11 = arith.constant 0 : index
      %17 = vector.load %arg5[%c0_10, %c0_11] : memref<1x256xf32, #tpu.memory_space<vmem>>, vector<1x256xf32>
      tpu.vector_store %arg5[%c0_10, %c0_11], %16 {strides = array<i32>} : memref<1x256xf32, #tpu.memory_space<vmem>>, vector<1x256xf32>,
      %c0_12 = arith.constant 0 : index
      %c0_13 = arith.constant 0 : index
      %18 = vector.load %arg6[%c0_12, %c0_13] : memref<1x256xf32, #tpu.memory_space<vmem>>, vector<1x256xf32>
      %19 = arith.maximumf %18, %5 : vector<1x256xf32>
      %c0_14 = arith.constant 0 : index
      %c0_15 = arith.constant 0 : index
      %20 = vector.load %arg6[%c0_14, %c0_15] : memref<1x256xf32, #tpu.memory_space<vmem>>, vector<1x256xf32>
      tpu.vector_store %arg6[%c0_14, %c0_15], %19 {strides = array<i32>} : memref<1x256xf32, #tpu.memory_space<vmem>>, vector<1x256xf32>,
    } else {
    }
    %c0_i32_6 = arith.constant 0 : i32
    %12 = arith.cmpi eq, %arg1, %c0_i32_6 : i32
    %13 = arith.extui %12 : i1 to i32
    %c0_i32_7 = arith.constant 0 : i32
    %14 = arith.cmpi ne, %13, %c0_i32_7 : i32
    scf.if %14 {
      %cst_8 = arith.constant 0.000000e+00 : f32
      %15 = vector.broadcast %cst_8 : f32 to vector<22x22xf32>
      %c0_9 = arith.constant 0 : index
      %c0_10 = arith.constant 0 : index
      %16 = vector.load %arg7[%c0_9, %c0_10] : memref<22x22xf32, #tpu.memory_space<vmem>>, vector<22x22xf32>
      tpu.vector_store %arg7[%c0_9, %c0_10], %15 {strides = array<i32>} : memref<22x22xf32, #tpu.memory_space<vmem>>, vector<22x22xf32>,
      %cst_11 = arith.constant 0.000000e+00 : f32
      %17 = vector.broadcast %cst_11 : f32 to vector<22x22xf32>
      %c0_12 = arith.constant 0 : index
      %c0_13 = arith.constant 0 : index
      %18 = vector.load %arg8[%c0_12, %c0_13] : memref<22x22xf32, #tpu.memory_space<vmem>>, vector<22x22xf32>
      tpu.vector_store %arg8[%c0_12, %c0_13], %17 {strides = array<i32>} : memref<22x22xf32, #tpu.memory_space<vmem>>, vector<22x22xf32>,
      %c0_14 = arith.constant 0 : index
      %c0_15 = arith.constant 0 : index
      %19 = vector.load %arg5[%c0_14, %c0_15] : memref<1x256xf32, #tpu.memory_space<vmem>>, vector<1x16xf32>
      %c3 = arith.constant 3 : index
      %c3_16 = arith.constant 3 : index
      %20 = vector.load %arg7[%c3, %c3_16] : memref<22x22xf32, #tpu.memory_space<vmem>>, vector<1x16xf32>
      tpu.vector_store %arg7[%c3, %c3_16], %19 {strides = array<i32>} : memref<22x22xf32, #tpu.memory_space<vmem>>, vector<1x16xf32>,
      %c0_17 = arith.constant 0 : index
      %c0_18 = arith.constant 0 : index
      %21 = vector.load %arg6[%c0_17, %c0_18] : memref<1x256xf32, #tpu.memory_space<vmem>>, vector<1x16xf32>
      %c3_19 = arith.constant 3 : index
      %c3_20 = arith.constant 3 : index
      %22 = vector.load %arg8[%c3_19, %c3_20] : memref<22x22xf32, #tpu.memory_space<vmem>>, vector<1x16xf32>
      tpu.vector_store %arg8[%c3_19, %c3_20], %21 {strides = array<i32>} : memref<22x22xf32, #tpu.memory_space<vmem>>, vector<1x16xf32>,
      %c0_21 = arith.constant 0 : index
      %c16 = arith.constant 16 : index
      %23 = vector.load %arg5[%c0_21, %c16] : memref<1x256xf32, #tpu.memory_space<vmem>>, vector<1x16xf32>
      %c4 = arith.constant 4 : index
      %c3_22 = arith.constant 3 : index
      %24 = vector.load %arg7[%c4, %c3_22] : memref<22x22xf32, #tpu.memory_space<vmem>>, vector<1x16xf32>
      tpu.vector_store %arg7[%c4, %c3_22], %23 {strides = array<i32>} : memref<22x22xf32, #tpu.memory_space<vmem>>, vector<1x16xf32>,
      %c0_23 = arith.constant 0 : index
      %c16_24 = arith.constant 16 : index
      %25 = vector.load %arg6[%c0_23, %c16_24] : memref<1x256xf32, #tpu.memory_space<vmem>>, vector<1x16xf32>
      %c4_25 = arith.constant 4 : index
      %c3_26 = arith.constant 3 : index
      %26 = vector.load %arg8[%c4_25, %c3_26] : memref<22x22xf32, #tpu.memory_space<vmem>>, vector<1x16xf32>
      tpu.vector_store %arg8[%c4_25, %c3_26], %25 {strides = array<i32>} : memref<22x22xf32, #tpu.memory_space<vmem>>, vector<1x16xf32>,
      %c0_27 = arith.constant 0 : index
      %c32 = arith.constant 32 : index
      %27 = vector.load %arg5[%c0_27, %c32] : memref<1x256xf32, #tpu.memory_space<vmem>>, vector<1x16xf32>
      %c5 = arith.constant 5 : index
      %c3_28 = arith.constant 3 : index
      %28 = vector.load %arg7[%c5, %c3_28] : memref<22x22xf32, #tpu.memory_space<vmem>>, vector<1x16xf32>
      tpu.vector_store %arg7[%c5, %c3_28], %27 {strides = array<i32>} : memref<22x22xf32, #tpu.memory_space<vmem>>, vector<1x16xf32>,
      %c0_29 = arith.constant 0 : index
      %c32_30 = arith.constant 32 : index
      %29 = vector.load %arg6[%c0_29, %c32_30] : memref<1x256xf32, #tpu.memory_space<vmem>>, vector<1x16xf32>
      %c5_31 = arith.constant 5 : index
      %c3_32 = arith.constant 3 : index
      %30 = vector.load %arg8[%c5_31, %c3_32] : memref<22x22xf32, #tpu.memory_space<vmem>>, vector<1x16xf32>
      tpu.vector_store %arg8[%c5_31, %c3_32], %29 {strides = array<i32>} : memref<22x22xf32, #tpu.memory_space<vmem>>, vector<1x16xf32>,
      %c0_33 = arith.constant 0 : index
      %c48 = arith.constant 48 : index
      %31 = vector.load %arg5[%c0_33, %c48] : memref<1x256xf32, #tpu.memory_space<vmem>>, vector<1x16xf32>
      %c6 = arith.constant 6 : index
      %c3_34 = arith.constant 3 : index
      %32 = vector.load %arg7[%c6, %c3_34] : memref<22x22xf32, #tpu.memory_space<vmem>>, vector<1x16xf32>
      tpu.vector_store %arg7[%c6, %c3_34], %31 {strides = array<i32>} : memref<22x22xf32, #tpu.memory_space<vmem>>, vector<1x16xf32>,
      %c0_35 = arith.constant 0 : index
      %c48_36 = arith.constant 48 : index
      %33 = vector.load %arg6[%c0_35, %c48_36] : memref<1x256xf32, #tpu.memory_space<vmem>>, vector<1x16xf32>
      %c6_37 = arith.constant 6 : index
      %c3_38 = arith.constant 3 : index
      %34 = vector.load %arg8[%c6_37, %c3_38] : memref<22x22xf32, #tpu.memory_space<vmem>>, vector<1x16xf32>
      tpu.vector_store %arg8[%c6_37, %c3_38], %33 {strides = array<i32>} : memref<22x22xf32, #tpu.memory_space<vmem>>, vector<1x16xf32>,
      %c0_39 = arith.constant 0 : index
      %c64 = arith.constant 64 : index
      %35 = vector.load %arg5[%c0_39, %c64] : memref<1x256xf32, #tpu.memory_space<vmem>>, vector<1x16xf32>
      %c7 = arith.constant 7 : index
      %c3_40 = arith.constant 3 : index
      %36 = vector.load %arg7[%c7, %c3_40] : memref<22x22xf32, #tpu.memory_space<vmem>>, vector<1x16xf32>
      tpu.vector_store %arg7[%c7, %c3_40], %35 {strides = array<i32>} : memref<22x22xf32, #tpu.memory_space<vmem>>, vector<1x16xf32>,
      %c0_41 = arith.constant 0 : index
      %c64_42 = arith.constant 64 : index
      %37 = vector.load %arg6[%c0_41, %c64_42] : memref<1x256xf32, #tpu.memory_space<vmem>>, vector<1x16xf32>
      %c7_43 = arith.constant 7 : index
      %c3_44 = arith.constant 3 : index
      %38 = vector.load %arg8[%c7_43, %c3_44] : memref<22x22xf32, #tpu.memory_space<vmem>>, vector<1x16xf32>
      tpu.vector_store %arg8[%c7_43, %c3_44], %37 {strides = array<i32>} : memref<22x22xf32, #tpu.memory_space<vmem>>, vector<1x16xf32>,
      %c0_45 = arith.constant 0 : index
      %c80 = arith.constant 80 : index
      %39 = vector.load %arg5[%c0_45, %c80] : memref<1x256xf32, #tpu.memory_space<vmem>>, vector<1x16xf32>
      %c8 = arith.constant 8 : index
      %c3_46 = arith.constant 3 : index
      %40 = vector.load %arg7[%c8, %c3_46] : memref<22x22xf32, #tpu.memory_space<vmem>>, vector<1x16xf32>
      tpu.vector_store %arg7[%c8, %c3_46], %39 {strides = array<i32>} : memref<22x22xf32, #tpu.memory_space<vmem>>, vector<1x16xf32>,
      %c0_47 = arith.constant 0 : index
      %c80_48 = arith.constant 80 : index
      %41 = vector.load %arg6[%c0_47, %c80_48] : memref<1x256xf32, #tpu.memory_space<vmem>>, vector<1x16xf32>
      %c8_49 = arith.constant 8 : index
      %c3_50 = arith.constant 3 : index
      %42 = vector.load %arg8[%c8_49, %c3_50] : memref<22x22xf32, #tpu.memory_space<vmem>>, vector<1x16xf32>
      tpu.vector_store %arg8[%c8_49, %c3_50], %41 {strides = array<i32>} : memref<22x22xf32, #tpu.memory_space<vmem>>, vector<1x16xf32>,
      %c0_51 = arith.constant 0 : index
      %c96 = arith.constant 96 : index
      %43 = vector.load %arg5[%c0_51, %c96] : memref<1x256xf32, #tpu.memory_space<vmem>>, vector<1x16xf32>
      %c9 = arith.constant 9 : index
      %c3_52 = arith.constant 3 : index
      %44 = vector.load %arg7[%c9, %c3_52] : memref<22x22xf32, #tpu.memory_space<vmem>>, vector<1x16xf32>
      tpu.vector_store %arg7[%c9, %c3_52], %43 {strides = array<i32>} : memref<22x22xf32, #tpu.memory_space<vmem>>, vector<1x16xf32>,
      %c0_53 = arith.constant 0 : index
      %c96_54 = arith.constant 96 : index
      %45 = vector.load %arg6[%c0_53, %c96_54] : memref<1x256xf32, #tpu.memory_space<vmem>>, vector<1x16xf32>
      %c9_55 = arith.constant 9 : index
      %c3_56 = arith.constant 3 : index
      %46 = vector.load %arg8[%c9_55, %c3_56] : memref<22x22xf32, #tpu.memory_space<vmem>>, vector<1x16xf32>
      tpu.vector_store %arg8[%c9_55, %c3_56], %45 {strides = array<i32>} : memref<22x22xf32, #tpu.memory_space<vmem>>, vector<1x16xf32>,
      %c0_57 = arith.constant 0 : index
      %c112 = arith.constant 112 : index
      %47 = vector.load %arg5[%c0_57, %c112] : memref<1x256xf32, #tpu.memory_space<vmem>>, vector<1x16xf32>
      %c10 = arith.constant 10 : index
      %c3_58 = arith.constant 3 : index
      %48 = vector.load %arg7[%c10, %c3_58] : memref<22x22xf32, #tpu.memory_space<vmem>>, vector<1x16xf32>
      tpu.vector_store %arg7[%c10, %c3_58], %47 {strides = array<i32>} : memref<22x22xf32, #tpu.memory_space<vmem>>, vector<1x16xf32>,
      %c0_59 = arith.constant 0 : index
      %c112_60 = arith.constant 112 : index
      %49 = vector.load %arg6[%c0_59, %c112_60] : memref<1x256xf32, #tpu.memory_space<vmem>>, vector<1x16xf32>
      %c10_61 = arith.constant 10 : index
      %c3_62 = arith.constant 3 : index
      %50 = vector.load %arg8[%c10_61, %c3_62] : memref<22x22xf32, #tpu.memory_space<vmem>>, vector<1x16xf32>
      tpu.vector_store %arg8[%c10_61, %c3_62], %49 {strides = array<i32>} : memref<22x22xf32, #tpu.memory_space<vmem>>, vector<1x16xf32>,
      %c0_63 = arith.constant 0 : index
      %c128 = arith.constant 128 : index
      %51 = vector.load %arg5[%c0_63, %c128] : memref<1x256xf32, #tpu.memory_space<vmem>>, vector<1x16xf32>
      %c11 = arith.constant 11 : index
      %c3_64 = arith.constant 3 : index
      %52 = vector.load %arg7[%c11, %c3_64] : memref<22x22xf32, #tpu.memory_space<vmem>>, vector<1x16xf32>
      tpu.vector_store %arg7[%c11, %c3_64], %51 {strides = array<i32>} : memref<22x22xf32, #tpu.memory_space<vmem>>, vector<1x16xf32>,
      %c0_65 = arith.constant 0 : index
      %c128_66 = arith.constant 128 : index
      %53 = vector.load %arg6[%c0_65, %c128_66] : memref<1x256xf32, #tpu.memory_space<vmem>>, vector<1x16xf32>
      %c11_67 = arith.constant 11 : index
      %c3_68 = arith.constant 3 : index
      %54 = vector.load %arg8[%c11_67, %c3_68] : memref<22x22xf32, #tpu.memory_space<vmem>>, vector<1x16xf32>
      tpu.vector_store %arg8[%c11_67, %c3_68], %53 {strides = array<i32>} : memref<22x22xf32, #tpu.memory_space<vmem>>, vector<1x16xf32>,
      %c0_69 = arith.constant 0 : index
      %c144 = arith.constant 144 : index
      %55 = vector.load %arg5[%c0_69, %c144] : memref<1x256xf32, #tpu.memory_space<vmem>>, vector<1x16xf32>
      %c12 = arith.constant 12 : index
      %c3_70 = arith.constant 3 : index
      %56 = vector.load %arg7[%c12, %c3_70] : memref<22x22xf32, #tpu.memory_space<vmem>>, vector<1x16xf32>
      tpu.vector_store %arg7[%c12, %c3_70], %55 {strides = array<i32>} : memref<22x22xf32, #tpu.memory_space<vmem>>, vector<1x16xf32>,
      %c0_71 = arith.constant 0 : index
      %c144_72 = arith.constant 144 : index
      %57 = vector.load %arg6[%c0_71, %c144_72] : memref<1x256xf32, #tpu.memory_space<vmem>>, vector<1x16xf32>
      %c12_73 = arith.constant 12 : index
      %c3_74 = arith.constant 3 : index
      %58 = vector.load %arg8[%c12_73, %c3_74] : memref<22x22xf32, #tpu.memory_space<vmem>>, vector<1x16xf32>
      tpu.vector_store %arg8[%c12_73, %c3_74], %57 {strides = array<i32>} : memref<22x22xf32, #tpu.memory_space<vmem>>, vector<1x16xf32>,
      %c0_75 = arith.constant 0 : index
      %c160 = arith.constant 160 : index
      %59 = vector.load %arg5[%c0_75, %c160] : memref<1x256xf32, #tpu.memory_space<vmem>>, vector<1x16xf32>
      %c13 = arith.constant 13 : index
      %c3_76 = arith.constant 3 : index
      %60 = vector.load %arg7[%c13, %c3_76] : memref<22x22xf32, #tpu.memory_space<vmem>>, vector<1x16xf32>
      tpu.vector_store %arg7[%c13, %c3_76], %59 {strides = array<i32>} : memref<22x22xf32, #tpu.memory_space<vmem>>, vector<1x16xf32>,
      %c0_77 = arith.constant 0 : index
      %c160_78 = arith.constant 160 : index
      %61 = vector.load %arg6[%c0_77, %c160_78] : memref<1x256xf32, #tpu.memory_space<vmem>>, vector<1x16xf32>
      %c13_79 = arith.constant 13 : index
      %c3_80 = arith.constant 3 : index
      %62 = vector.load %arg8[%c13_79, %c3_80] : memref<22x22xf32, #tpu.memory_space<vmem>>, vector<1x16xf32>
      tpu.vector_store %arg8[%c13_79, %c3_80], %61 {strides = array<i32>} : memref<22x22xf32, #tpu.memory_space<vmem>>, vector<1x16xf32>,
      %c0_81 = arith.constant 0 : index
      %c176 = arith.constant 176 : index
      %63 = vector.load %arg5[%c0_81, %c176] : memref<1x256xf32, #tpu.memory_space<vmem>>, vector<1x16xf32>
      %c14 = arith.constant 14 : index
      %c3_82 = arith.constant 3 : index
      %64 = vector.load %arg7[%c14, %c3_82] : memref<22x22xf32, #tpu.memory_space<vmem>>, vector<1x16xf32>
      tpu.vector_store %arg7[%c14, %c3_82], %63 {strides = array<i32>} : memref<22x22xf32, #tpu.memory_space<vmem>>, vector<1x16xf32>,
      %c0_83 = arith.constant 0 : index
      %c176_84 = arith.constant 176 : index
      %65 = vector.load %arg6[%c0_83, %c176_84] : memref<1x256xf32, #tpu.memory_space<vmem>>, vector<1x16xf32>
      %c14_85 = arith.constant 14 : index
      %c3_86 = arith.constant 3 : index
      %66 = vector.load %arg8[%c14_85, %c3_86] : memref<22x22xf32, #tpu.memory_space<vmem>>, vector<1x16xf32>
      tpu.vector_store %arg8[%c14_85, %c3_86], %65 {strides = array<i32>} : memref<22x22xf32, #tpu.memory_space<vmem>>, vector<1x16xf32>,
      %c0_87 = arith.constant 0 : index
      %c192 = arith.constant 192 : index
      %67 = vector.load %arg5[%c0_87, %c192] : memref<1x256xf32, #tpu.memory_space<vmem>>, vector<1x16xf32>
      %c15 = arith.constant 15 : index
      %c3_88 = arith.constant 3 : index
      %68 = vector.load %arg7[%c15, %c3_88] : memref<22x22xf32, #tpu.memory_space<vmem>>, vector<1x16xf32>
      tpu.vector_store %arg7[%c15, %c3_88], %67 {strides = array<i32>} : memref<22x22xf32, #tpu.memory_space<vmem>>, vector<1x16xf32>,
      %c0_89 = arith.constant 0 : index
      %c192_90 = arith.constant 192 : index
      %69 = vector.load %arg6[%c0_89, %c192_90] : memref<1x256xf32, #tpu.memory_space<vmem>>, vector<1x16xf32>
      %c15_91 = arith.constant 15 : index
      %c3_92 = arith.constant 3 : index
      %70 = vector.load %arg8[%c15_91, %c3_92] : memref<22x22xf32, #tpu.memory_space<vmem>>, vector<1x16xf32>
      tpu.vector_store %arg8[%c15_91, %c3_92], %69 {strides = array<i32>} : memref<22x22xf32, #tpu.memory_space<vmem>>, vector<1x16xf32>,
      %c0_93 = arith.constant 0 : index
      %c208 = arith.constant 208 : index
      %71 = vector.load %arg5[%c0_93, %c208] : memref<1x256xf32, #tpu.memory_space<vmem>>, vector<1x16xf32>
      %c16_94 = arith.constant 16 : index
      %c3_95 = arith.constant 3 : index
      %72 = vector.load %arg7[%c16_94, %c3_95] : memref<22x22xf32, #tpu.memory_space<vmem>>, vector<1x16xf32>
      tpu.vector_store %arg7[%c16_94, %c3_95], %71 {strides = array<i32>} : memref<22x22xf32, #tpu.memory_space<vmem>>, vector<1x16xf32>,
      %c0_96 = arith.constant 0 : index
      %c208_97 = arith.constant 208 : index
      %73 = vector.load %arg6[%c0_96, %c208_97] : memref<1x256xf32, #tpu.memory_space<vmem>>, vector<1x16xf32>
      %c16_98 = arith.constant 16 : index
      %c3_99 = arith.constant 3 : index
      %74 = vector.load %arg8[%c16_98, %c3_99] : memref<22x22xf32, #tpu.memory_space<vmem>>, vector<1x16xf32>
      tpu.vector_store %arg8[%c16_98, %c3_99], %73 {strides = array<i32>} : memref<22x22xf32, #tpu.memory_space<vmem>>, vector<1x16xf32>,
      %c0_100 = arith.constant 0 : index
      %c224 = arith.constant 224 : index
      %75 = vector.load %arg5[%c0_100, %c224] : memref<1x256xf32, #tpu.memory_space<vmem>>, vector<1x16xf32>
      %c17 = arith.constant 17 : index
      %c3_101 = arith.constant 3 : index
      %76 = vector.load %arg7[%c17, %c3_101] : memref<22x22xf32, #tpu.memory_space<vmem>>, vector<1x16xf32>
      tpu.vector_store %arg7[%c17, %c3_101], %75 {strides = array<i32>} : memref<22x22xf32, #tpu.memory_space<vmem>>, vector<1x16xf32>,
      %c0_102 = arith.constant 0 : index
      %c224_103 = arith.constant 224 : index
      %77 = vector.load %arg6[%c0_102, %c224_103] : memref<1x256xf32, #tpu.memory_space<vmem>>, vector<1x16xf32>
      %c17_104 = arith.constant 17 : index
      %c3_105 = arith.constant 3 : index
      %78 = vector.load %arg8[%c17_104, %c3_105] : memref<22x22xf32, #tpu.memory_space<vmem>>, vector<1x16xf32>
      tpu.vector_store %arg8[%c17_104, %c3_105], %77 {strides = array<i32>} : memref<22x22xf32, #tpu.memory_space<vmem>>, vector<1x16xf32>,
      %c0_106 = arith.constant 0 : index
      %c240 = arith.constant 240 : index
      %79 = vector.load %arg5[%c0_106, %c240] : memref<1x256xf32, #tpu.memory_space<vmem>>, vector<1x16xf32>
      %c18 = arith.constant 18 : index
      %c3_107 = arith.constant 3 : index
      %80 = vector.load %arg7[%c18, %c3_107] : memref<22x22xf32, #tpu.memory_space<vmem>>, vector<1x16xf32>
      tpu.vector_store %arg7[%c18, %c3_107], %79 {strides = array<i32>} : memref<22x22xf32, #tpu.memory_space<vmem>>, vector<1x16xf32>,
      %c0_108 = arith.constant 0 : index
      %c240_109 = arith.constant 240 : index
      %81 = vector.load %arg6[%c0_108, %c240_109] : memref<1x256xf32, #tpu.memory_space<vmem>>, vector<1x16xf32>
      %c18_110 = arith.constant 18 : index
      %c3_111 = arith.constant 3 : index
      %82 = vector.load %arg8[%c18_110, %c3_111] : memref<22x22xf32, #tpu.memory_space<vmem>>, vector<1x16xf32>
      tpu.vector_store %arg8[%c18_110, %c3_111], %81 {strides = array<i32>} : memref<22x22xf32, #tpu.memory_space<vmem>>, vector<1x16xf32>,
      %cst_112 = arith.constant 0.000000e+00 : f32
      %83 = vector.broadcast %cst_112 : f32 to vector<16x16xf32>
      %cst_113 = arith.constant 0.000000e+00 : f32
      %84 = vector.broadcast %cst_113 : f32 to vector<16x16xf32>
      %cst_114 = arith.constant 0.000000e+00 : f32
      %85 = vector.broadcast %cst_114 : f32 to vector<16x16xf32>
      %cst_115 = arith.constant 0.000000e+00 : f32
      %86 = vector.broadcast %cst_115 : f32 to vector<16x16xf32>
      %c0_116 = arith.constant 0 : index
      %87 = memref.load %arg3[%c0_116] : memref<98xf32, #tpu.memory_space<smem>>
      %c49 = arith.constant 49 : index
      %88 = memref.load %arg3[%c49] : memref<98xf32, #tpu.memory_space<smem>>
      %c0_117 = arith.constant 0 : index
      %c0_118 = arith.constant 0 : index
      %89 = vector.load %arg7[%c0_117, %c0_118] : memref<22x22xf32, #tpu.memory_space<vmem>>, vector<16x16xf32>
      %c0_119 = arith.constant 0 : index
      %c0_120 = arith.constant 0 : index
      %90 = vector.load %arg8[%c0_119, %c0_120] : memref<22x22xf32, #tpu.memory_space<vmem>>, vector<16x16xf32>
      %91 = vector.broadcast %87 : f32 to vector<16x16xf32>
      %92 = arith.mulf %91, %89 : vector<16x16xf32>
      %93 = arith.addf %83, %92 : vector<16x16xf32>
      %94 = vector.broadcast %88 : f32 to vector<16x16xf32>
      %95 = arith.mulf %94, %90 : vector<16x16xf32>
      %96 = arith.addf %84, %95 : vector<16x16xf32>
      %c1 = arith.constant 1 : index
      %97 = memref.load %arg3[%c1] : memref<98xf32, #tpu.memory_space<smem>>
      %c50 = arith.constant 50 : index
      %98 = memref.load %arg3[%c50] : memref<98xf32, #tpu.memory_space<smem>>
      %c0_121 = arith.constant 0 : index
      %c1_122 = arith.constant 1 : index
      %99 = vector.load %arg7[%c0_121, %c1_122] : memref<22x22xf32, #tpu.memory_space<vmem>>, vector<16x16xf32>
      %c0_123 = arith.constant 0 : index
      %c1_124 = arith.constant 1 : index
      %100 = vector.load %arg8[%c0_123, %c1_124] : memref<22x22xf32, #tpu.memory_space<vmem>>, vector<16x16xf32>
      %101 = vector.broadcast %97 : f32 to vector<16x16xf32>
      %102 = arith.mulf %101, %99 : vector<16x16xf32>
      %103 = arith.addf %85, %102 : vector<16x16xf32>
      %104 = vector.broadcast %98 : f32 to vector<16x16xf32>
      %105 = arith.mulf %104, %100 : vector<16x16xf32>
      %106 = arith.addf %86, %105 : vector<16x16xf32>
      %c2 = arith.constant 2 : index
      %107 = memref.load %arg3[%c2] : memref<98xf32, #tpu.memory_space<smem>>
      %c51 = arith.constant 51 : index
      %108 = memref.load %arg3[%c51] : memref<98xf32, #tpu.memory_space<smem>>
      %c0_125 = arith.constant 0 : index
      %c2_126 = arith.constant 2 : index
      %109 = vector.load %arg7[%c0_125, %c2_126] : memref<22x22xf32, #tpu.memory_space<vmem>>, vector<16x16xf32>
      %c0_127 = arith.constant 0 : index
      %c2_128 = arith.constant 2 : index
      %110 = vector.load %arg8[%c0_127, %c2_128] : memref<22x22xf32, #tpu.memory_space<vmem>>, vector<16x16xf32>
      %111 = vector.broadcast %107 : f32 to vector<16x16xf32>
      %112 = arith.mulf %111, %109 : vector<16x16xf32>
      %113 = arith.addf %93, %112 : vector<16x16xf32>
      %114 = vector.broadcast %108 : f32 to vector<16x16xf32>
      %115 = arith.mulf %114, %110 : vector<16x16xf32>
      %116 = arith.addf %96, %115 : vector<16x16xf32>
      %c3_129 = arith.constant 3 : index
      %117 = memref.load %arg3[%c3_129] : memref<98xf32, #tpu.memory_space<smem>>
      %c52 = arith.constant 52 : index
      %118 = memref.load %arg3[%c52] : memref<98xf32, #tpu.memory_space<smem>>
      %c0_130 = arith.constant 0 : index
      %c3_131 = arith.constant 3 : index
      %119 = vector.load %arg7[%c0_130, %c3_131] : memref<22x22xf32, #tpu.memory_space<vmem>>, vector<16x16xf32>
      %c0_132 = arith.constant 0 : index
      %c3_133 = arith.constant 3 : index
      %120 = vector.load %arg8[%c0_132, %c3_133] : memref<22x22xf32, #tpu.memory_space<vmem>>, vector<16x16xf32>
      %121 = vector.broadcast %117 : f32 to vector<16x16xf32>
      %122 = arith.mulf %121, %119 : vector<16x16xf32>
      %123 = arith.addf %103, %122 : vector<16x16xf32>
      %124 = vector.broadcast %118 : f32 to vector<16x16xf32>
      %125 = arith.mulf %124, %120 : vector<16x16xf32>
      %126 = arith.addf %106, %125 : vector<16x16xf32>
      %c4_134 = arith.constant 4 : index
      %127 = memref.load %arg3[%c4_134] : memref<98xf32, #tpu.memory_space<smem>>
      %c53 = arith.constant 53 : index
      %128 = memref.load %arg3[%c53] : memref<98xf32, #tpu.memory_space<smem>>
      %c0_135 = arith.constant 0 : index
      %c4_136 = arith.constant 4 : index
      %129 = vector.load %arg7[%c0_135, %c4_136] : memref<22x22xf32, #tpu.memory_space<vmem>>, vector<16x16xf32>
      %c0_137 = arith.constant 0 : index
      %c4_138 = arith.constant 4 : index
      %130 = vector.load %arg8[%c0_137, %c4_138] : memref<22x22xf32, #tpu.memory_space<vmem>>, vector<16x16xf32>
      %131 = vector.broadcast %127 : f32 to vector<16x16xf32>
      %132 = arith.mulf %131, %129 : vector<16x16xf32>
      %133 = arith.addf %113, %132 : vector<16x16xf32>
      %134 = vector.broadcast %128 : f32 to vector<16x16xf32>
      %135 = arith.mulf %134, %130 : vector<16x16xf32>
      %136 = arith.addf %116, %135 : vector<16x16xf32>
      %c5_139 = arith.constant 5 : index
      %137 = memref.load %arg3[%c5_139] : memref<98xf32, #tpu.memory_space<smem>>
      %c54 = arith.constant 54 : index
      %138 = memref.load %arg3[%c54] : memref<98xf32, #tpu.memory_space<smem>>
      %c0_140 = arith.constant 0 : index
      %c5_141 = arith.constant 5 : index
      %139 = vector.load %arg7[%c0_140, %c5_141] : memref<22x22xf32, #tpu.memory_space<vmem>>, vector<16x16xf32>
      %c0_142 = arith.constant 0 : index
      %c5_143 = arith.constant 5 : index
      %140 = vector.load %arg8[%c0_142, %c5_143] : memref<22x22xf32, #tpu.memory_space<vmem>>, vector<16x16xf32>
      %141 = vector.broadcast %137 : f32 to vector<16x16xf32>
      %142 = arith.mulf %141, %139 : vector<16x16xf32>
      %143 = arith.addf %123, %142 : vector<16x16xf32>
      %144 = vector.broadcast %138 : f32 to vector<16x16xf32>
      %145 = arith.mulf %144, %140 : vector<16x16xf32>
      %146 = arith.addf %126, %145 : vector<16x16xf32>
      %c6_144 = arith.constant 6 : index
      %147 = memref.load %arg3[%c6_144] : memref<98xf32, #tpu.memory_space<smem>>
      %c55 = arith.constant 55 : index
      %148 = memref.load %arg3[%c55] : memref<98xf32, #tpu.memory_space<smem>>
      %c0_145 = arith.constant 0 : index
      %c6_146 = arith.constant 6 : index
      %149 = vector.load %arg7[%c0_145, %c6_146] : memref<22x22xf32, #tpu.memory_space<vmem>>, vector<16x16xf32>
      %c0_147 = arith.constant 0 : index
      %c6_148 = arith.constant 6 : index
      %150 = vector.load %arg8[%c0_147, %c6_148] : memref<22x22xf32, #tpu.memory_space<vmem>>, vector<16x16xf32>
      %151 = vector.broadcast %147 : f32 to vector<16x16xf32>
      %152 = arith.mulf %151, %149 : vector<16x16xf32>
      %153 = arith.addf %133, %152 : vector<16x16xf32>
      %154 = vector.broadcast %148 : f32 to vector<16x16xf32>
      %155 = arith.mulf %154, %150 : vector<16x16xf32>
      %156 = arith.addf %136, %155 : vector<16x16xf32>
      %c7_149 = arith.constant 7 : index
      %157 = memref.load %arg3[%c7_149] : memref<98xf32, #tpu.memory_space<smem>>
      %c56 = arith.constant 56 : index
      %158 = memref.load %arg3[%c56] : memref<98xf32, #tpu.memory_space<smem>>
      %c1_150 = arith.constant 1 : index
      %c0_151 = arith.constant 0 : index
      %159 = vector.load %arg7[%c1_150, %c0_151] : memref<22x22xf32, #tpu.memory_space<vmem>>, vector<16x16xf32>
      %c1_152 = arith.constant 1 : index
      %c0_153 = arith.constant 0 : index
      %160 = vector.load %arg8[%c1_152, %c0_153] : memref<22x22xf32, #tpu.memory_space<vmem>>, vector<16x16xf32>
      %161 = vector.broadcast %157 : f32 to vector<16x16xf32>
      %162 = arith.mulf %161, %159 : vector<16x16xf32>
      %163 = arith.addf %143, %162 : vector<16x16xf32>
      %164 = vector.broadcast %158 : f32 to vector<16x16xf32>
      %165 = arith.mulf %164, %160 : vector<16x16xf32>
      %166 = arith.addf %146, %165 : vector<16x16xf32>
      %c8_154 = arith.constant 8 : index
      %167 = memref.load %arg3[%c8_154] : memref<98xf32, #tpu.memory_space<smem>>
      %c57 = arith.constant 57 : index
      %168 = memref.load %arg3[%c57] : memref<98xf32, #tpu.memory_space<smem>>
      %c1_155 = arith.constant 1 : index
      %c1_156 = arith.constant 1 : index
      %169 = vector.load %arg7[%c1_155, %c1_156] : memref<22x22xf32, #tpu.memory_space<vmem>>, vector<16x16xf32>
      %c1_157 = arith.constant 1 : index
      %c1_158 = arith.constant 1 : index
      %170 = vector.load %arg8[%c1_157, %c1_158] : memref<22x22xf32, #tpu.memory_space<vmem>>, vector<16x16xf32>
      %171 = vector.broadcast %167 : f32 to vector<16x16xf32>
      %172 = arith.mulf %171, %169 : vector<16x16xf32>
      %173 = arith.addf %153, %172 : vector<16x16xf32>
      %174 = vector.broadcast %168 : f32 to vector<16x16xf32>
      %175 = arith.mulf %174, %170 : vector<16x16xf32>
      %176 = arith.addf %156, %175 : vector<16x16xf32>
      %c9_159 = arith.constant 9 : index
      %177 = memref.load %arg3[%c9_159] : memref<98xf32, #tpu.memory_space<smem>>
      %c58 = arith.constant 58 : index
      %178 = memref.load %arg3[%c58] : memref<98xf32, #tpu.memory_space<smem>>
      %c1_160 = arith.constant 1 : index
      %c2_161 = arith.constant 2 : index
      %179 = vector.load %arg7[%c1_160, %c2_161] : memref<22x22xf32, #tpu.memory_space<vmem>>, vector<16x16xf32>
      %c1_162 = arith.constant 1 : index
      %c2_163 = arith.constant 2 : index
      %180 = vector.load %arg8[%c1_162, %c2_163] : memref<22x22xf32, #tpu.memory_space<vmem>>, vector<16x16xf32>
      %181 = vector.broadcast %177 : f32 to vector<16x16xf32>
      %182 = arith.mulf %181, %179 : vector<16x16xf32>
      %183 = arith.addf %163, %182 : vector<16x16xf32>
      %184 = vector.broadcast %178 : f32 to vector<16x16xf32>
      %185 = arith.mulf %184, %180 : vector<16x16xf32>
      %186 = arith.addf %166, %185 : vector<16x16xf32>
      %c10_164 = arith.constant 10 : index
      %187 = memref.load %arg3[%c10_164] : memref<98xf32, #tpu.memory_space<smem>>
      %c59 = arith.constant 59 : index
      %188 = memref.load %arg3[%c59] : memref<98xf32, #tpu.memory_space<smem>>
      %c1_165 = arith.constant 1 : index
      %c3_166 = arith.constant 3 : index
      %189 = vector.load %arg7[%c1_165, %c3_166] : memref<22x22xf32, #tpu.memory_space<vmem>>, vector<16x16xf32>
      %c1_167 = arith.constant 1 : index
      %c3_168 = arith.constant 3 : index
      %190 = vector.load %arg8[%c1_167, %c3_168] : memref<22x22xf32, #tpu.memory_space<vmem>>, vector<16x16xf32>
      %191 = vector.broadcast %187 : f32 to vector<16x16xf32>
      %192 = arith.mulf %191, %189 : vector<16x16xf32>
      %193 = arith.addf %173, %192 : vector<16x16xf32>
      %194 = vector.broadcast %188 : f32 to vector<16x16xf32>
      %195 = arith.mulf %194, %190 : vector<16x16xf32>
      %196 = arith.addf %176, %195 : vector<16x16xf32>
      %c11_169 = arith.constant 11 : index
      %197 = memref.load %arg3[%c11_169] : memref<98xf32, #tpu.memory_space<smem>>
      %c60 = arith.constant 60 : index
      %198 = memref.load %arg3[%c60] : memref<98xf32, #tpu.memory_space<smem>>
      %c1_170 = arith.constant 1 : index
      %c4_171 = arith.constant 4 : index
      %199 = vector.load %arg7[%c1_170, %c4_171] : memref<22x22xf32, #tpu.memory_space<vmem>>, vector<16x16xf32>
      %c1_172 = arith.constant 1 : index
      %c4_173 = arith.constant 4 : index
      %200 = vector.load %arg8[%c1_172, %c4_173] : memref<22x22xf32, #tpu.memory_space<vmem>>, vector<16x16xf32>
      %201 = vector.broadcast %197 : f32 to vector<16x16xf32>
      %202 = arith.mulf %201, %199 : vector<16x16xf32>
      %203 = arith.addf %183, %202 : vector<16x16xf32>
      %204 = vector.broadcast %198 : f32 to vector<16x16xf32>
      %205 = arith.mulf %204, %200 : vector<16x16xf32>
      %206 = arith.addf %186, %205 : vector<16x16xf32>
      %c12_174 = arith.constant 12 : index
      %207 = memref.load %arg3[%c12_174] : memref<98xf32, #tpu.memory_space<smem>>
      %c61 = arith.constant 61 : index
      %208 = memref.load %arg3[%c61] : memref<98xf32, #tpu.memory_space<smem>>
      %c1_175 = arith.constant 1 : index
      %c5_176 = arith.constant 5 : index
      %209 = vector.load %arg7[%c1_175, %c5_176] : memref<22x22xf32, #tpu.memory_space<vmem>>, vector<16x16xf32>
      %c1_177 = arith.constant 1 : index
      %c5_178 = arith.constant 5 : index
      %210 = vector.load %arg8[%c1_177, %c5_178] : memref<22x22xf32, #tpu.memory_space<vmem>>, vector<16x16xf32>
      %211 = vector.broadcast %207 : f32 to vector<16x16xf32>
      %212 = arith.mulf %211, %209 : vector<16x16xf32>
      %213 = arith.addf %193, %212 : vector<16x16xf32>
      %214 = vector.broadcast %208 : f32 to vector<16x16xf32>
      %215 = arith.mulf %214, %210 : vector<16x16xf32>
      %216 = arith.addf %196, %215 : vector<16x16xf32>
      %c13_179 = arith.constant 13 : index
      %217 = memref.load %arg3[%c13_179] : memref<98xf32, #tpu.memory_space<smem>>
      %c62 = arith.constant 62 : index
      %218 = memref.load %arg3[%c62] : memref<98xf32, #tpu.memory_space<smem>>
      %c1_180 = arith.constant 1 : index
      %c6_181 = arith.constant 6 : index
      %219 = vector.load %arg7[%c1_180, %c6_181] : memref<22x22xf32, #tpu.memory_space<vmem>>, vector<16x16xf32>
      %c1_182 = arith.constant 1 : index
      %c6_183 = arith.constant 6 : index
      %220 = vector.load %arg8[%c1_182, %c6_183] : memref<22x22xf32, #tpu.memory_space<vmem>>, vector<16x16xf32>
      %221 = vector.broadcast %217 : f32 to vector<16x16xf32>
      %222 = arith.mulf %221, %219 : vector<16x16xf32>
      %223 = arith.addf %203, %222 : vector<16x16xf32>
      %224 = vector.broadcast %218 : f32 to vector<16x16xf32>
      %225 = arith.mulf %224, %220 : vector<16x16xf32>
      %226 = arith.addf %206, %225 : vector<16x16xf32>
      %c14_184 = arith.constant 14 : index
      %227 = memref.load %arg3[%c14_184] : memref<98xf32, #tpu.memory_space<smem>>
      %c63 = arith.constant 63 : index
      %228 = memref.load %arg3[%c63] : memref<98xf32, #tpu.memory_space<smem>>
      %c2_185 = arith.constant 2 : index
      %c0_186 = arith.constant 0 : index
      %229 = vector.load %arg7[%c2_185, %c0_186] : memref<22x22xf32, #tpu.memory_space<vmem>>, vector<16x16xf32>
      %c2_187 = arith.constant 2 : index
      %c0_188 = arith.constant 0 : index
      %230 = vector.load %arg8[%c2_187, %c0_188] : memref<22x22xf32, #tpu.memory_space<vmem>>, vector<16x16xf32>
      %231 = vector.broadcast %227 : f32 to vector<16x16xf32>
      %232 = arith.mulf %231, %229 : vector<16x16xf32>
      %233 = arith.addf %213, %232 : vector<16x16xf32>
      %234 = vector.broadcast %228 : f32 to vector<16x16xf32>
      %235 = arith.mulf %234, %230 : vector<16x16xf32>
      %236 = arith.addf %216, %235 : vector<16x16xf32>
      %c15_189 = arith.constant 15 : index
      %237 = memref.load %arg3[%c15_189] : memref<98xf32, #tpu.memory_space<smem>>
      %c64_190 = arith.constant 64 : index
      %238 = memref.load %arg3[%c64_190] : memref<98xf32, #tpu.memory_space<smem>>
      %c2_191 = arith.constant 2 : index
      %c1_192 = arith.constant 1 : index
      %239 = vector.load %arg7[%c2_191, %c1_192] : memref<22x22xf32, #tpu.memory_space<vmem>>, vector<16x16xf32>
      %c2_193 = arith.constant 2 : index
      %c1_194 = arith.constant 1 : index
      %240 = vector.load %arg8[%c2_193, %c1_194] : memref<22x22xf32, #tpu.memory_space<vmem>>, vector<16x16xf32>
      %241 = vector.broadcast %237 : f32 to vector<16x16xf32>
      %242 = arith.mulf %241, %239 : vector<16x16xf32>
      %243 = arith.addf %223, %242 : vector<16x16xf32>
      %244 = vector.broadcast %238 : f32 to vector<16x16xf32>
      %245 = arith.mulf %244, %240 : vector<16x16xf32>
      %246 = arith.addf %226, %245 : vector<16x16xf32>
      %c16_195 = arith.constant 16 : index
      %247 = memref.load %arg3[%c16_195] : memref<98xf32, #tpu.memory_space<smem>>
      %c65 = arith.constant 65 : index
      %248 = memref.load %arg3[%c65] : memref<98xf32, #tpu.memory_space<smem>>
      %c2_196 = arith.constant 2 : index
      %c2_197 = arith.constant 2 : index
      %249 = vector.load %arg7[%c2_196, %c2_197] : memref<22x22xf32, #tpu.memory_space<vmem>>, vector<16x16xf32>
      %c2_198 = arith.constant 2 : index
      %c2_199 = arith.constant 2 : index
      %250 = vector.load %arg8[%c2_198, %c2_199] : memref<22x22xf32, #tpu.memory_space<vmem>>, vector<16x16xf32>
      %251 = vector.broadcast %247 : f32 to vector<16x16xf32>
      %252 = arith.mulf %251, %249 : vector<16x16xf32>
      %253 = arith.addf %233, %252 : vector<16x16xf32>
      %254 = vector.broadcast %248 : f32 to vector<16x16xf32>
      %255 = arith.mulf %254, %250 : vector<16x16xf32>
      %256 = arith.addf %236, %255 : vector<16x16xf32>
      %c17_200 = arith.constant 17 : index
      %257 = memref.load %arg3[%c17_200] : memref<98xf32, #tpu.memory_space<smem>>
      %c66 = arith.constant 66 : index
      %258 = memref.load %arg3[%c66] : memref<98xf32, #tpu.memory_space<smem>>
      %c2_201 = arith.constant 2 : index
      %c3_202 = arith.constant 3 : index
      %259 = vector.load %arg7[%c2_201, %c3_202] : memref<22x22xf32, #tpu.memory_space<vmem>>, vector<16x16xf32>
      %c2_203 = arith.constant 2 : index
      %c3_204 = arith.constant 3 : index
      %260 = vector.load %arg8[%c2_203, %c3_204] : memref<22x22xf32, #tpu.memory_space<vmem>>, vector<16x16xf32>
      %261 = vector.broadcast %257 : f32 to vector<16x16xf32>
      %262 = arith.mulf %261, %259 : vector<16x16xf32>
      %263 = arith.addf %243, %262 : vector<16x16xf32>
      %264 = vector.broadcast %258 : f32 to vector<16x16xf32>
      %265 = arith.mulf %264, %260 : vector<16x16xf32>
      %266 = arith.addf %246, %265 : vector<16x16xf32>
      %c18_205 = arith.constant 18 : index
      %267 = memref.load %arg3[%c18_205] : memref<98xf32, #tpu.memory_space<smem>>
      %c67 = arith.constant 67 : index
      %268 = memref.load %arg3[%c67] : memref<98xf32, #tpu.memory_space<smem>>
      %c2_206 = arith.constant 2 : index
      %c4_207 = arith.constant 4 : index
      %269 = vector.load %arg7[%c2_206, %c4_207] : memref<22x22xf32, #tpu.memory_space<vmem>>, vector<16x16xf32>
      %c2_208 = arith.constant 2 : index
      %c4_209 = arith.constant 4 : index
      %270 = vector.load %arg8[%c2_208, %c4_209] : memref<22x22xf32, #tpu.memory_space<vmem>>, vector<16x16xf32>
      %271 = vector.broadcast %267 : f32 to vector<16x16xf32>
      %272 = arith.mulf %271, %269 : vector<16x16xf32>
      %273 = arith.addf %253, %272 : vector<16x16xf32>
      %274 = vector.broadcast %268 : f32 to vector<16x16xf32>
      %275 = arith.mulf %274, %270 : vector<16x16xf32>
      %276 = arith.addf %256, %275 : vector<16x16xf32>
      %c19 = arith.constant 19 : index
      %277 = memref.load %arg3[%c19] : memref<98xf32, #tpu.memory_space<smem>>
      %c68 = arith.constant 68 : index
      %278 = memref.load %arg3[%c68] : memref<98xf32, #tpu.memory_space<smem>>
      %c2_210 = arith.constant 2 : index
      %c5_211 = arith.constant 5 : index
      %279 = vector.load %arg7[%c2_210, %c5_211] : memref<22x22xf32, #tpu.memory_space<vmem>>, vector<16x16xf32>
      %c2_212 = arith.constant 2 : index
      %c5_213 = arith.constant 5 : index
      %280 = vector.load %arg8[%c2_212, %c5_213] : memref<22x22xf32, #tpu.memory_space<vmem>>, vector<16x16xf32>
      %281 = vector.broadcast %277 : f32 to vector<16x16xf32>
      %282 = arith.mulf %281, %279 : vector<16x16xf32>
      %283 = arith.addf %263, %282 : vector<16x16xf32>
      %284 = vector.broadcast %278 : f32 to vector<16x16xf32>
      %285 = arith.mulf %284, %280 : vector<16x16xf32>
      %286 = arith.addf %266, %285 : vector<16x16xf32>
      %c20 = arith.constant 20 : index
      %287 = memref.load %arg3[%c20] : memref<98xf32, #tpu.memory_space<smem>>
      %c69 = arith.constant 69 : index
      %288 = memref.load %arg3[%c69] : memref<98xf32, #tpu.memory_space<smem>>
      %c2_214 = arith.constant 2 : index
      %c6_215 = arith.constant 6 : index
      %289 = vector.load %arg7[%c2_214, %c6_215] : memref<22x22xf32, #tpu.memory_space<vmem>>, vector<16x16xf32>
      %c2_216 = arith.constant 2 : index
      %c6_217 = arith.constant 6 : index
      %290 = vector.load %arg8[%c2_216, %c6_217] : memref<22x22xf32, #tpu.memory_space<vmem>>, vector<16x16xf32>
      %291 = vector.broadcast %287 : f32 to vector<16x16xf32>
      %292 = arith.mulf %291, %289 : vector<16x16xf32>
      %293 = arith.addf %273, %292 : vector<16x16xf32>
      %294 = vector.broadcast %288 : f32 to vector<16x16xf32>
      %295 = arith.mulf %294, %290 : vector<16x16xf32>
      %296 = arith.addf %276, %295 : vector<16x16xf32>
      %c21 = arith.constant 21 : index
      %297 = memref.load %arg3[%c21] : memref<98xf32, #tpu.memory_space<smem>>
      %c70 = arith.constant 70 : index
      %298 = memref.load %arg3[%c70] : memref<98xf32, #tpu.memory_space<smem>>
      %c3_218 = arith.constant 3 : index
      %c0_219 = arith.constant 0 : index
      %299 = vector.load %arg7[%c3_218, %c0_219] : memref<22x22xf32, #tpu.memory_space<vmem>>, vector<16x16xf32>
      %c3_220 = arith.constant 3 : index
      %c0_221 = arith.constant 0 : index
      %300 = vector.load %arg8[%c3_220, %c0_221] : memref<22x22xf32, #tpu.memory_space<vmem>>, vector<16x16xf32>
      %301 = vector.broadcast %297 : f32 to vector<16x16xf32>
      %302 = arith.mulf %301, %299 : vector<16x16xf32>
      %303 = arith.addf %283, %302 : vector<16x16xf32>
      %304 = vector.broadcast %298 : f32 to vector<16x16xf32>
      %305 = arith.mulf %304, %300 : vector<16x16xf32>
      %306 = arith.addf %286, %305 : vector<16x16xf32>
      %c22 = arith.constant 22 : index
      %307 = memref.load %arg3[%c22] : memref<98xf32, #tpu.memory_space<smem>>
      %c71 = arith.constant 71 : index
      %308 = memref.load %arg3[%c71] : memref<98xf32, #tpu.memory_space<smem>>
      %c3_222 = arith.constant 3 : index
      %c1_223 = arith.constant 1 : index
      %309 = vector.load %arg7[%c3_222, %c1_223] : memref<22x22xf32, #tpu.memory_space<vmem>>, vector<16x16xf32>
      %c3_224 = arith.constant 3 : index
      %c1_225 = arith.constant 1 : index
      %310 = vector.load %arg8[%c3_224, %c1_225] : memref<22x22xf32, #tpu.memory_space<vmem>>, vector<16x16xf32>
      %311 = vector.broadcast %307 : f32 to vector<16x16xf32>
      %312 = arith.mulf %311, %309 : vector<16x16xf32>
      %313 = arith.addf %293, %312 : vector<16x16xf32>
      %314 = vector.broadcast %308 : f32 to vector<16x16xf32>
      %315 = arith.mulf %314, %310 : vector<16x16xf32>
      %316 = arith.addf %296, %315 : vector<16x16xf32>
      %c23 = arith.constant 23 : index
      %317 = memref.load %arg3[%c23] : memref<98xf32, #tpu.memory_space<smem>>
      %c72 = arith.constant 72 : index
      %318 = memref.load %arg3[%c72] : memref<98xf32, #tpu.memory_space<smem>>
      %c3_226 = arith.constant 3 : index
      %c2_227 = arith.constant 2 : index
      %319 = vector.load %arg7[%c3_226, %c2_227] : memref<22x22xf32, #tpu.memory_space<vmem>>, vector<16x16xf32>
      %c3_228 = arith.constant 3 : index
      %c2_229 = arith.constant 2 : index
      %320 = vector.load %arg8[%c3_228, %c2_229] : memref<22x22xf32, #tpu.memory_space<vmem>>, vector<16x16xf32>
      %321 = vector.broadcast %317 : f32 to vector<16x16xf32>
      %322 = arith.mulf %321, %319 : vector<16x16xf32>
      %323 = arith.addf %303, %322 : vector<16x16xf32>
      %324 = vector.broadcast %318 : f32 to vector<16x16xf32>
      %325 = arith.mulf %324, %320 : vector<16x16xf32>
      %326 = arith.addf %306, %325 : vector<16x16xf32>
      %c24 = arith.constant 24 : index
      %327 = memref.load %arg3[%c24] : memref<98xf32, #tpu.memory_space<smem>>
      %c73 = arith.constant 73 : index
      %328 = memref.load %arg3[%c73] : memref<98xf32, #tpu.memory_space<smem>>
      %c3_230 = arith.constant 3 : index
      %c3_231 = arith.constant 3 : index
      %329 = vector.load %arg7[%c3_230, %c3_231] : memref<22x22xf32, #tpu.memory_space<vmem>>, vector<16x16xf32>
      %c3_232 = arith.constant 3 : index
      %c3_233 = arith.constant 3 : index
      %330 = vector.load %arg8[%c3_232, %c3_233] : memref<22x22xf32, #tpu.memory_space<vmem>>, vector<16x16xf32>
      %331 = vector.broadcast %327 : f32 to vector<16x16xf32>
      %332 = arith.mulf %331, %329 : vector<16x16xf32>
      %333 = arith.addf %313, %332 : vector<16x16xf32>
      %334 = vector.broadcast %328 : f32 to vector<16x16xf32>
      %335 = arith.mulf %334, %330 : vector<16x16xf32>
      %336 = arith.addf %316, %335 : vector<16x16xf32>
      %c25 = arith.constant 25 : index
      %337 = memref.load %arg3[%c25] : memref<98xf32, #tpu.memory_space<smem>>
      %c74 = arith.constant 74 : index
      %338 = memref.load %arg3[%c74] : memref<98xf32, #tpu.memory_space<smem>>
      %c3_234 = arith.constant 3 : index
      %c4_235 = arith.constant 4 : index
      %339 = vector.load %arg7[%c3_234, %c4_235] : memref<22x22xf32, #tpu.memory_space<vmem>>, vector<16x16xf32>
      %c3_236 = arith.constant 3 : index
      %c4_237 = arith.constant 4 : index
      %340 = vector.load %arg8[%c3_236, %c4_237] : memref<22x22xf32, #tpu.memory_space<vmem>>, vector<16x16xf32>
      %341 = vector.broadcast %337 : f32 to vector<16x16xf32>
      %342 = arith.mulf %341, %339 : vector<16x16xf32>
      %343 = arith.addf %323, %342 : vector<16x16xf32>
      %344 = vector.broadcast %338 : f32 to vector<16x16xf32>
      %345 = arith.mulf %344, %340 : vector<16x16xf32>
      %346 = arith.addf %326, %345 : vector<16x16xf32>
      %c26 = arith.constant 26 : index
      %347 = memref.load %arg3[%c26] : memref<98xf32, #tpu.memory_space<smem>>
      %c75 = arith.constant 75 : index
      %348 = memref.load %arg3[%c75] : memref<98xf32, #tpu.memory_space<smem>>
      %c3_238 = arith.constant 3 : index
      %c5_239 = arith.constant 5 : index
      %349 = vector.load %arg7[%c3_238, %c5_239] : memref<22x22xf32, #tpu.memory_space<vmem>>, vector<16x16xf32>
      %c3_240 = arith.constant 3 : index
      %c5_241 = arith.constant 5 : index
      %350 = vector.load %arg8[%c3_240, %c5_241] : memref<22x22xf32, #tpu.memory_space<vmem>>, vector<16x16xf32>
      %351 = vector.broadcast %347 : f32 to vector<16x16xf32>
      %352 = arith.mulf %351, %349 : vector<16x16xf32>
      %353 = arith.addf %333, %352 : vector<16x16xf32>
      %354 = vector.broadcast %348 : f32 to vector<16x16xf32>
      %355 = arith.mulf %354, %350 : vector<16x16xf32>
      %356 = arith.addf %336, %355 : vector<16x16xf32>
      %c27 = arith.constant 27 : index
      %357 = memref.load %arg3[%c27] : memref<98xf32, #tpu.memory_space<smem>>
      %c76 = arith.constant 76 : index
      %358 = memref.load %arg3[%c76] : memref<98xf32, #tpu.memory_space<smem>>
      %c3_242 = arith.constant 3 : index
      %c6_243 = arith.constant 6 : index
      %359 = vector.load %arg7[%c3_242, %c6_243] : memref<22x22xf32, #tpu.memory_space<vmem>>, vector<16x16xf32>
      %c3_244 = arith.constant 3 : index
      %c6_245 = arith.constant 6 : index
      %360 = vector.load %arg8[%c3_244, %c6_245] : memref<22x22xf32, #tpu.memory_space<vmem>>, vector<16x16xf32>
      %361 = vector.broadcast %357 : f32 to vector<16x16xf32>
      %362 = arith.mulf %361, %359 : vector<16x16xf32>
      %363 = arith.addf %343, %362 : vector<16x16xf32>
      %364 = vector.broadcast %358 : f32 to vector<16x16xf32>
      %365 = arith.mulf %364, %360 : vector<16x16xf32>
      %366 = arith.addf %346, %365 : vector<16x16xf32>
      %c28 = arith.constant 28 : index
      %367 = memref.load %arg3[%c28] : memref<98xf32, #tpu.memory_space<smem>>
      %c77 = arith.constant 77 : index
      %368 = memref.load %arg3[%c77] : memref<98xf32, #tpu.memory_space<smem>>
      %c4_246 = arith.constant 4 : index
      %c0_247 = arith.constant 0 : index
      %369 = vector.load %arg7[%c4_246, %c0_247] : memref<22x22xf32, #tpu.memory_space<vmem>>, vector<16x16xf32>
      %c4_248 = arith.constant 4 : index
      %c0_249 = arith.constant 0 : index
      %370 = vector.load %arg8[%c4_248, %c0_249] : memref<22x22xf32, #tpu.memory_space<vmem>>, vector<16x16xf32>
      %371 = vector.broadcast %367 : f32 to vector<16x16xf32>
      %372 = arith.mulf %371, %369 : vector<16x16xf32>
      %373 = arith.addf %353, %372 : vector<16x16xf32>
      %374 = vector.broadcast %368 : f32 to vector<16x16xf32>
      %375 = arith.mulf %374, %370 : vector<16x16xf32>
      %376 = arith.addf %356, %375 : vector<16x16xf32>
      %c29 = arith.constant 29 : index
      %377 = memref.load %arg3[%c29] : memref<98xf32, #tpu.memory_space<smem>>
      %c78 = arith.constant 78 : index
      %378 = memref.load %arg3[%c78] : memref<98xf32, #tpu.memory_space<smem>>
      %c4_250 = arith.constant 4 : index
      %c1_251 = arith.constant 1 : index
      %379 = vector.load %arg7[%c4_250, %c1_251] : memref<22x22xf32, #tpu.memory_space<vmem>>, vector<16x16xf32>
      %c4_252 = arith.constant 4 : index
      %c1_253 = arith.constant 1 : index
      %380 = vector.load %arg8[%c4_252, %c1_253] : memref<22x22xf32, #tpu.memory_space<vmem>>, vector<16x16xf32>
      %381 = vector.broadcast %377 : f32 to vector<16x16xf32>
      %382 = arith.mulf %381, %379 : vector<16x16xf32>
      %383 = arith.addf %363, %382 : vector<16x16xf32>
      %384 = vector.broadcast %378 : f32 to vector<16x16xf32>
      %385 = arith.mulf %384, %380 : vector<16x16xf32>
      %386 = arith.addf %366, %385 : vector<16x16xf32>
      %c30 = arith.constant 30 : index
      %387 = memref.load %arg3[%c30] : memref<98xf32, #tpu.memory_space<smem>>
      %c79 = arith.constant 79 : index
      %388 = memref.load %arg3[%c79] : memref<98xf32, #tpu.memory_space<smem>>
      %c4_254 = arith.constant 4 : index
      %c2_255 = arith.constant 2 : index
      %389 = vector.load %arg7[%c4_254, %c2_255] : memref<22x22xf32, #tpu.memory_space<vmem>>, vector<16x16xf32>
      %c4_256 = arith.constant 4 : index
      %c2_257 = arith.constant 2 : index
      %390 = vector.load %arg8[%c4_256, %c2_257] : memref<22x22xf32, #tpu.memory_space<vmem>>, vector<16x16xf32>
      %391 = vector.broadcast %387 : f32 to vector<16x16xf32>
      %392 = arith.mulf %391, %389 : vector<16x16xf32>
      %393 = arith.addf %373, %392 : vector<16x16xf32>
      %394 = vector.broadcast %388 : f32 to vector<16x16xf32>
      %395 = arith.mulf %394, %390 : vector<16x16xf32>
      %396 = arith.addf %376, %395 : vector<16x16xf32>
      %c31 = arith.constant 31 : index
      %397 = memref.load %arg3[%c31] : memref<98xf32, #tpu.memory_space<smem>>
      %c80_258 = arith.constant 80 : index
      %398 = memref.load %arg3[%c80_258] : memref<98xf32, #tpu.memory_space<smem>>
      %c4_259 = arith.constant 4 : index
      %c3_260 = arith.constant 3 : index
      %399 = vector.load %arg7[%c4_259, %c3_260] : memref<22x22xf32, #tpu.memory_space<vmem>>, vector<16x16xf32>
      %c4_261 = arith.constant 4 : index
      %c3_262 = arith.constant 3 : index
      %400 = vector.load %arg8[%c4_261, %c3_262] : memref<22x22xf32, #tpu.memory_space<vmem>>, vector<16x16xf32>
      %401 = vector.broadcast %397 : f32 to vector<16x16xf32>
      %402 = arith.mulf %401, %399 : vector<16x16xf32>
      %403 = arith.addf %383, %402 : vector<16x16xf32>
      %404 = vector.broadcast %398 : f32 to vector<16x16xf32>
      %405 = arith.mulf %404, %400 : vector<16x16xf32>
      %406 = arith.addf %386, %405 : vector<16x16xf32>
      %c32_263 = arith.constant 32 : index
      %407 = memref.load %arg3[%c32_263] : memref<98xf32, #tpu.memory_space<smem>>
      %c81 = arith.constant 81 : index
      %408 = memref.load %arg3[%c81] : memref<98xf32, #tpu.memory_space<smem>>
      %c4_264 = arith.constant 4 : index
      %c4_265 = arith.constant 4 : index
      %409 = vector.load %arg7[%c4_264, %c4_265] : memref<22x22xf32, #tpu.memory_space<vmem>>, vector<16x16xf32>
      %c4_266 = arith.constant 4 : index
      %c4_267 = arith.constant 4 : index
      %410 = vector.load %arg8[%c4_266, %c4_267] : memref<22x22xf32, #tpu.memory_space<vmem>>, vector<16x16xf32>
      %411 = vector.broadcast %407 : f32 to vector<16x16xf32>
      %412 = arith.mulf %411, %409 : vector<16x16xf32>
      %413 = arith.addf %393, %412 : vector<16x16xf32>
      %414 = vector.broadcast %408 : f32 to vector<16x16xf32>
      %415 = arith.mulf %414, %410 : vector<16x16xf32>
      %416 = arith.addf %396, %415 : vector<16x16xf32>
      %c33 = arith.constant 33 : index
      %417 = memref.load %arg3[%c33] : memref<98xf32, #tpu.memory_space<smem>>
      %c82 = arith.constant 82 : index
      %418 = memref.load %arg3[%c82] : memref<98xf32, #tpu.memory_space<smem>>
      %c4_268 = arith.constant 4 : index
      %c5_269 = arith.constant 5 : index
      %419 = vector.load %arg7[%c4_268, %c5_269] : memref<22x22xf32, #tpu.memory_space<vmem>>, vector<16x16xf32>
      %c4_270 = arith.constant 4 : index
      %c5_271 = arith.constant 5 : index
      %420 = vector.load %arg8[%c4_270, %c5_271] : memref<22x22xf32, #tpu.memory_space<vmem>>, vector<16x16xf32>
      %421 = vector.broadcast %417 : f32 to vector<16x16xf32>
      %422 = arith.mulf %421, %419 : vector<16x16xf32>
      %423 = arith.addf %403, %422 : vector<16x16xf32>
      %424 = vector.broadcast %418 : f32 to vector<16x16xf32>
      %425 = arith.mulf %424, %420 : vector<16x16xf32>
      %426 = arith.addf %406, %425 : vector<16x16xf32>
      %c34 = arith.constant 34 : index
      %427 = memref.load %arg3[%c34] : memref<98xf32, #tpu.memory_space<smem>>
      %c83 = arith.constant 83 : index
      %428 = memref.load %arg3[%c83] : memref<98xf32, #tpu.memory_space<smem>>
      %c4_272 = arith.constant 4 : index
      %c6_273 = arith.constant 6 : index
      %429 = vector.load %arg7[%c4_272, %c6_273] : memref<22x22xf32, #tpu.memory_space<vmem>>, vector<16x16xf32>
      %c4_274 = arith.constant 4 : index
      %c6_275 = arith.constant 6 : index
      %430 = vector.load %arg8[%c4_274, %c6_275] : memref<22x22xf32, #tpu.memory_space<vmem>>, vector<16x16xf32>
      %431 = vector.broadcast %427 : f32 to vector<16x16xf32>
      %432 = arith.mulf %431, %429 : vector<16x16xf32>
      %433 = arith.addf %413, %432 : vector<16x16xf32>
      %434 = vector.broadcast %428 : f32 to vector<16x16xf32>
      %435 = arith.mulf %434, %430 : vector<16x16xf32>
      %436 = arith.addf %416, %435 : vector<16x16xf32>
      %c35 = arith.constant 35 : index
      %437 = memref.load %arg3[%c35] : memref<98xf32, #tpu.memory_space<smem>>
      %c84 = arith.constant 84 : index
      %438 = memref.load %arg3[%c84] : memref<98xf32, #tpu.memory_space<smem>>
      %c5_276 = arith.constant 5 : index
      %c0_277 = arith.constant 0 : index
      %439 = vector.load %arg7[%c5_276, %c0_277] : memref<22x22xf32, #tpu.memory_space<vmem>>, vector<16x16xf32>
      %c5_278 = arith.constant 5 : index
      %c0_279 = arith.constant 0 : index
      %440 = vector.load %arg8[%c5_278, %c0_279] : memref<22x22xf32, #tpu.memory_space<vmem>>, vector<16x16xf32>
      %441 = vector.broadcast %437 : f32 to vector<16x16xf32>
      %442 = arith.mulf %441, %439 : vector<16x16xf32>
      %443 = arith.addf %423, %442 : vector<16x16xf32>
      %444 = vector.broadcast %438 : f32 to vector<16x16xf32>
      %445 = arith.mulf %444, %440 : vector<16x16xf32>
      %446 = arith.addf %426, %445 : vector<16x16xf32>
      %c36 = arith.constant 36 : index
      %447 = memref.load %arg3[%c36] : memref<98xf32, #tpu.memory_space<smem>>
      %c85 = arith.constant 85 : index
      %448 = memref.load %arg3[%c85] : memref<98xf32, #tpu.memory_space<smem>>
      %c5_280 = arith.constant 5 : index
      %c1_281 = arith.constant 1 : index
      %449 = vector.load %arg7[%c5_280, %c1_281] : memref<22x22xf32, #tpu.memory_space<vmem>>, vector<16x16xf32>
      %c5_282 = arith.constant 5 : index
      %c1_283 = arith.constant 1 : index
      %450 = vector.load %arg8[%c5_282, %c1_283] : memref<22x22xf32, #tpu.memory_space<vmem>>, vector<16x16xf32>
      %451 = vector.broadcast %447 : f32 to vector<16x16xf32>
      %452 = arith.mulf %451, %449 : vector<16x16xf32>
      %453 = arith.addf %433, %452 : vector<16x16xf32>
      %454 = vector.broadcast %448 : f32 to vector<16x16xf32>
      %455 = arith.mulf %454, %450 : vector<16x16xf32>
      %456 = arith.addf %436, %455 : vector<16x16xf32>
      %c37 = arith.constant 37 : index
      %457 = memref.load %arg3[%c37] : memref<98xf32, #tpu.memory_space<smem>>
      %c86 = arith.constant 86 : index
      %458 = memref.load %arg3[%c86] : memref<98xf32, #tpu.memory_space<smem>>
      %c5_284 = arith.constant 5 : index
      %c2_285 = arith.constant 2 : index
      %459 = vector.load %arg7[%c5_284, %c2_285] : memref<22x22xf32, #tpu.memory_space<vmem>>, vector<16x16xf32>
      %c5_286 = arith.constant 5 : index
      %c2_287 = arith.constant 2 : index
      %460 = vector.load %arg8[%c5_286, %c2_287] : memref<22x22xf32, #tpu.memory_space<vmem>>, vector<16x16xf32>
      %461 = vector.broadcast %457 : f32 to vector<16x16xf32>
      %462 = arith.mulf %461, %459 : vector<16x16xf32>
      %463 = arith.addf %443, %462 : vector<16x16xf32>
      %464 = vector.broadcast %458 : f32 to vector<16x16xf32>
      %465 = arith.mulf %464, %460 : vector<16x16xf32>
      %466 = arith.addf %446, %465 : vector<16x16xf32>
      %c38 = arith.constant 38 : index
      %467 = memref.load %arg3[%c38] : memref<98xf32, #tpu.memory_space<smem>>
      %c87 = arith.constant 87 : index
      %468 = memref.load %arg3[%c87] : memref<98xf32, #tpu.memory_space<smem>>
      %c5_288 = arith.constant 5 : index
      %c3_289 = arith.constant 3 : index
      %469 = vector.load %arg7[%c5_288, %c3_289] : memref<22x22xf32, #tpu.memory_space<vmem>>, vector<16x16xf32>
      %c5_290 = arith.constant 5 : index
      %c3_291 = arith.constant 3 : index
      %470 = vector.load %arg8[%c5_290, %c3_291] : memref<22x22xf32, #tpu.memory_space<vmem>>, vector<16x16xf32>
      %471 = vector.broadcast %467 : f32 to vector<16x16xf32>
      %472 = arith.mulf %471, %469 : vector<16x16xf32>
      %473 = arith.addf %453, %472 : vector<16x16xf32>
      %474 = vector.broadcast %468 : f32 to vector<16x16xf32>
      %475 = arith.mulf %474, %470 : vector<16x16xf32>
      %476 = arith.addf %456, %475 : vector<16x16xf32>
      %c39 = arith.constant 39 : index
      %477 = memref.load %arg3[%c39] : memref<98xf32, #tpu.memory_space<smem>>
      %c88 = arith.constant 88 : index
      %478 = memref.load %arg3[%c88] : memref<98xf32, #tpu.memory_space<smem>>
      %c5_292 = arith.constant 5 : index
      %c4_293 = arith.constant 4 : index
      %479 = vector.load %arg7[%c5_292, %c4_293] : memref<22x22xf32, #tpu.memory_space<vmem>>, vector<16x16xf32>
      %c5_294 = arith.constant 5 : index
      %c4_295 = arith.constant 4 : index
      %480 = vector.load %arg8[%c5_294, %c4_295] : memref<22x22xf32, #tpu.memory_space<vmem>>, vector<16x16xf32>
      %481 = vector.broadcast %477 : f32 to vector<16x16xf32>
      %482 = arith.mulf %481, %479 : vector<16x16xf32>
      %483 = arith.addf %463, %482 : vector<16x16xf32>
      %484 = vector.broadcast %478 : f32 to vector<16x16xf32>
      %485 = arith.mulf %484, %480 : vector<16x16xf32>
      %486 = arith.addf %466, %485 : vector<16x16xf32>
      %c40 = arith.constant 40 : index
      %487 = memref.load %arg3[%c40] : memref<98xf32, #tpu.memory_space<smem>>
      %c89 = arith.constant 89 : index
      %488 = memref.load %arg3[%c89] : memref<98xf32, #tpu.memory_space<smem>>
      %c5_296 = arith.constant 5 : index
      %c5_297 = arith.constant 5 : index
      %489 = vector.load %arg7[%c5_296, %c5_297] : memref<22x22xf32, #tpu.memory_space<vmem>>, vector<16x16xf32>
      %c5_298 = arith.constant 5 : index
      %c5_299 = arith.constant 5 : index
      %490 = vector.load %arg8[%c5_298, %c5_299] : memref<22x22xf32, #tpu.memory_space<vmem>>, vector<16x16xf32>
      %491 = vector.broadcast %487 : f32 to vector<16x16xf32>
      %492 = arith.mulf %491, %489 : vector<16x16xf32>
      %493 = arith.addf %473, %492 : vector<16x16xf32>
      %494 = vector.broadcast %488 : f32 to vector<16x16xf32>
      %495 = arith.mulf %494, %490 : vector<16x16xf32>
      %496 = arith.addf %476, %495 : vector<16x16xf32>
      %c41 = arith.constant 41 : index
      %497 = memref.load %arg3[%c41] : memref<98xf32, #tpu.memory_space<smem>>
      %c90 = arith.constant 90 : index
      %498 = memref.load %arg3[%c90] : memref<98xf32, #tpu.memory_space<smem>>
      %c5_300 = arith.constant 5 : index
      %c6_301 = arith.constant 6 : index
      %499 = vector.load %arg7[%c5_300, %c6_301] : memref<22x22xf32, #tpu.memory_space<vmem>>, vector<16x16xf32>
      %c5_302 = arith.constant 5 : index
      %c6_303 = arith.constant 6 : index
      %500 = vector.load %arg8[%c5_302, %c6_303] : memref<22x22xf32, #tpu.memory_space<vmem>>, vector<16x16xf32>
      %501 = vector.broadcast %497 : f32 to vector<16x16xf32>
      %502 = arith.mulf %501, %499 : vector<16x16xf32>
      %503 = arith.addf %483, %502 : vector<16x16xf32>
      %504 = vector.broadcast %498 : f32 to vector<16x16xf32>
      %505 = arith.mulf %504, %500 : vector<16x16xf32>
      %506 = arith.addf %486, %505 : vector<16x16xf32>
      %c42 = arith.constant 42 : index
      %507 = memref.load %arg3[%c42] : memref<98xf32, #tpu.memory_space<smem>>
      %c91 = arith.constant 91 : index
      %508 = memref.load %arg3[%c91] : memref<98xf32, #tpu.memory_space<smem>>
      %c6_304 = arith.constant 6 : index
      %c0_305 = arith.constant 0 : index
      %509 = vector.load %arg7[%c6_304, %c0_305] : memref<22x22xf32, #tpu.memory_space<vmem>>, vector<16x16xf32>
      %c6_306 = arith.constant 6 : index
      %c0_307 = arith.constant 0 : index
      %510 = vector.load %arg8[%c6_306, %c0_307] : memref<22x22xf32, #tpu.memory_space<vmem>>, vector<16x16xf32>
      %511 = vector.broadcast %507 : f32 to vector<16x16xf32>
      %512 = arith.mulf %511, %509 : vector<16x16xf32>
      %513 = arith.addf %493, %512 : vector<16x16xf32>
      %514 = vector.broadcast %508 : f32 to vector<16x16xf32>
      %515 = arith.mulf %514, %510 : vector<16x16xf32>
      %516 = arith.addf %496, %515 : vector<16x16xf32>
      %c43 = arith.constant 43 : index
      %517 = memref.load %arg3[%c43] : memref<98xf32, #tpu.memory_space<smem>>
      %c92 = arith.constant 92 : index
      %518 = memref.load %arg3[%c92] : memref<98xf32, #tpu.memory_space<smem>>
      %c6_308 = arith.constant 6 : index
      %c1_309 = arith.constant 1 : index
      %519 = vector.load %arg7[%c6_308, %c1_309] : memref<22x22xf32, #tpu.memory_space<vmem>>, vector<16x16xf32>
      %c6_310 = arith.constant 6 : index
      %c1_311 = arith.constant 1 : index
      %520 = vector.load %arg8[%c6_310, %c1_311] : memref<22x22xf32, #tpu.memory_space<vmem>>, vector<16x16xf32>
      %521 = vector.broadcast %517 : f32 to vector<16x16xf32>
      %522 = arith.mulf %521, %519 : vector<16x16xf32>
      %523 = arith.addf %503, %522 : vector<16x16xf32>
      %524 = vector.broadcast %518 : f32 to vector<16x16xf32>
      %525 = arith.mulf %524, %520 : vector<16x16xf32>
      %526 = arith.addf %506, %525 : vector<16x16xf32>
      %c44 = arith.constant 44 : index
      %527 = memref.load %arg3[%c44] : memref<98xf32, #tpu.memory_space<smem>>
      %c93 = arith.constant 93 : index
      %528 = memref.load %arg3[%c93] : memref<98xf32, #tpu.memory_space<smem>>
      %c6_312 = arith.constant 6 : index
      %c2_313 = arith.constant 2 : index
      %529 = vector.load %arg7[%c6_312, %c2_313] : memref<22x22xf32, #tpu.memory_space<vmem>>, vector<16x16xf32>
      %c6_314 = arith.constant 6 : index
      %c2_315 = arith.constant 2 : index
      %530 = vector.load %arg8[%c6_314, %c2_315] : memref<22x22xf32, #tpu.memory_space<vmem>>, vector<16x16xf32>
      %531 = vector.broadcast %527 : f32 to vector<16x16xf32>
      %532 = arith.mulf %531, %529 : vector<16x16xf32>
      %533 = arith.addf %513, %532 : vector<16x16xf32>
      %534 = vector.broadcast %528 : f32 to vector<16x16xf32>
      %535 = arith.mulf %534, %530 : vector<16x16xf32>
      %536 = arith.addf %516, %535 : vector<16x16xf32>
      %c45 = arith.constant 45 : index
      %537 = memref.load %arg3[%c45] : memref<98xf32, #tpu.memory_space<smem>>
      %c94 = arith.constant 94 : index
      %538 = memref.load %arg3[%c94] : memref<98xf32, #tpu.memory_space<smem>>
      %c6_316 = arith.constant 6 : index
      %c3_317 = arith.constant 3 : index
      %539 = vector.load %arg7[%c6_316, %c3_317] : memref<22x22xf32, #tpu.memory_space<vmem>>, vector<16x16xf32>
      %c6_318 = arith.constant 6 : index
      %c3_319 = arith.constant 3 : index
      %540 = vector.load %arg8[%c6_318, %c3_319] : memref<22x22xf32, #tpu.memory_space<vmem>>, vector<16x16xf32>
      %541 = vector.broadcast %537 : f32 to vector<16x16xf32>
      %542 = arith.mulf %541, %539 : vector<16x16xf32>
      %543 = arith.addf %523, %542 : vector<16x16xf32>
      %544 = vector.broadcast %538 : f32 to vector<16x16xf32>
      %545 = arith.mulf %544, %540 : vector<16x16xf32>
      %546 = arith.addf %526, %545 : vector<16x16xf32>
      %c46 = arith.constant 46 : index
      %547 = memref.load %arg3[%c46] : memref<98xf32, #tpu.memory_space<smem>>
      %c95 = arith.constant 95 : index
      %548 = memref.load %arg3[%c95] : memref<98xf32, #tpu.memory_space<smem>>
      %c6_320 = arith.constant 6 : index
      %c4_321 = arith.constant 4 : index
      %549 = vector.load %arg7[%c6_320, %c4_321] : memref<22x22xf32, #tpu.memory_space<vmem>>, vector<16x16xf32>
      %c6_322 = arith.constant 6 : index
      %c4_323 = arith.constant 4 : index
      %550 = vector.load %arg8[%c6_322, %c4_323] : memref<22x22xf32, #tpu.memory_space<vmem>>, vector<16x16xf32>
      %551 = vector.broadcast %547 : f32 to vector<16x16xf32>
      %552 = arith.mulf %551, %549 : vector<16x16xf32>
      %553 = arith.addf %533, %552 : vector<16x16xf32>
      %554 = vector.broadcast %548 : f32 to vector<16x16xf32>
      %555 = arith.mulf %554, %550 : vector<16x16xf32>
      %556 = arith.addf %536, %555 : vector<16x16xf32>
      %c47 = arith.constant 47 : index
      %557 = memref.load %arg3[%c47] : memref<98xf32, #tpu.memory_space<smem>>
      %c96_324 = arith.constant 96 : index
      %558 = memref.load %arg3[%c96_324] : memref<98xf32, #tpu.memory_space<smem>>
      %c6_325 = arith.constant 6 : index
      %c5_326 = arith.constant 5 : index
      %559 = vector.load %arg7[%c6_325, %c5_326] : memref<22x22xf32, #tpu.memory_space<vmem>>, vector<16x16xf32>
      %c6_327 = arith.constant 6 : index
      %c5_328 = arith.constant 5 : index
      %560 = vector.load %arg8[%c6_327, %c5_328] : memref<22x22xf32, #tpu.memory_space<vmem>>, vector<16x16xf32>
      %561 = vector.broadcast %557 : f32 to vector<16x16xf32>
      %562 = arith.mulf %561, %559 : vector<16x16xf32>
      %563 = arith.addf %543, %562 : vector<16x16xf32>
      %564 = vector.broadcast %558 : f32 to vector<16x16xf32>
      %565 = arith.mulf %564, %560 : vector<16x16xf32>
      %566 = arith.addf %546, %565 : vector<16x16xf32>
      %c48_329 = arith.constant 48 : index
      %567 = memref.load %arg3[%c48_329] : memref<98xf32, #tpu.memory_space<smem>>
      %c97 = arith.constant 97 : index
      %568 = memref.load %arg3[%c97] : memref<98xf32, #tpu.memory_space<smem>>
      %c6_330 = arith.constant 6 : index
      %c6_331 = arith.constant 6 : index
      %569 = vector.load %arg7[%c6_330, %c6_331] : memref<22x22xf32, #tpu.memory_space<vmem>>, vector<16x16xf32>
      %c6_332 = arith.constant 6 : index
      %c6_333 = arith.constant 6 : index
      %570 = vector.load %arg8[%c6_332, %c6_333] : memref<22x22xf32, #tpu.memory_space<vmem>>, vector<16x16xf32>
      %571 = vector.broadcast %567 : f32 to vector<16x16xf32>
      %572 = arith.mulf %571, %569 : vector<16x16xf32>
      %573 = arith.addf %553, %572 : vector<16x16xf32>
      %574 = vector.broadcast %568 : f32 to vector<16x16xf32>
      %575 = arith.mulf %574, %570 : vector<16x16xf32>
      %576 = arith.addf %556, %575 : vector<16x16xf32>
      %577 = arith.addf %573, %576 : vector<16x16xf32>
      %578 = arith.addf %563, %566 : vector<16x16xf32>
      %579 = arith.addf %577, %578 : vector<16x16xf32>
      %580 = arith.negf %579 : vector<16x16xf32>
      %581 = math.exp %580 : vector<16x16xf32>
      %cst_334 = arith.constant 1.000000e+00 : f32
      %582 = vector.broadcast %cst_334 : f32 to vector<16x16xf32>
      %583 = arith.addf %582, %581 : vector<16x16xf32>
      %584 = arith.divf %582, %583 : vector<16x16xf32>
      %c0_335 = arith.constant 0 : index
      %c0_336 = arith.constant 0 : index
      %c0_337 = arith.constant 0 : index
      %c0_338 = arith.constant 0 : index
      %585 = vector.load %arg4[%c0_335, %c0_336, %c0_337, %c0_338] : memref<1x1x16x16xf32, #tpu.memory_space<vmem>>, vector<1x1x16x16xf32>
      %586 = vector.shape_cast %585 : vector<1x1x16x16xf32> to vector<16x16xf32>
      %587 = vector.shape_cast %584 : vector<16x16xf32> to vector<1x1x16x16xf32>
      tpu.vector_store %arg4[%c0_335, %c0_336, %c0_337, %c0_338], %587 {strides = array<i32>} : memref<1x1x16x16xf32, #tpu.memory_space<vmem>>, vector<1x1x16x16xf32>,
    } else {
    }
    return
  }
  func.func @transform_0(%arg0: i32, %arg1: i32) -> (i32, i32, i32) {
    %c0_i32 = arith.constant 0 : i32
    %c0_i32_0 = arith.constant 0 : i32
    return %arg0, %arg1, %c0_i32 : i32, i32, i32
  }
  func.func @transform_1(%arg0: i32, %arg1: i32) -> i32 {
    %c0_i32 = arith.constant 0 : i32
    %c0_i32_0 = arith.constant 0 : i32
    return %c0_i32 : i32
  }
  func.func @transform_2(%arg0: i32, %arg1: i32) -> (i32, i32, i32, i32) {
    %c0_i32 = arith.constant 0 : i32
    %c0_i32_0 = arith.constant 0 : i32
    %c0_i32_1 = arith.constant 0 : i32
    %c0_i32_2 = arith.constant 0 : i32
    return %arg0, %c0_i32, %c0_i32_0, %c0_i32_1 : i32, i32, i32, i32
  }
}

</mosaic_0001>

<llo_original>
// kernel: tpu_custom_call.1
$region0: #{tpu_custom_call.1}
  #allocation0 [shape = 'u32[]', space=smem, size = 0x4, offset = 0x4, fixed_abs, tag = 'smem constant byte address 0x4 - core index']
  #allocation1 [shape = 'u32[144,128]{1,0:T(1,128)}', space=vmem, size = 0x12000, scoped, tag = 'internal scratch']
  #allocation2 [shape = 'f32[1,256]{1,0:T(1,128)}', space=vmem, size = 0x400, scoped, tag = 'scratch operand']
  #allocation3 [shape = 'f32[1,256]{1,0:T(1,128)}', space=vmem, size = 0x400, scoped, tag = 'scratch operand']
  #allocation4 [shape = 'f32[22,22]{1,0:T(8,128)}', space=vmem, size = 0x3000, scoped, tag = 'scratch operand']
  #allocation5 [shape = 'f32[22,22]{1,0:T(8,128)}', space=vmem, size = 0x3000, scoped, tag = 'scratch operand']
  %s0 = inlined_call_operand.hbm [shape: f32[2,4,256], index: 0, kind: input, shape index: {}]
  %s1 = inlined_call_operand.vmem [shape: f32[98], index: 1, kind: input, shape index: {}]
  %s2 = inlined_call_operand.hbm [shape: f32[2,1,16,16], index: 2, kind: output, shape index: {}]
  %s3 = sld [smem:[#allocation0]]
  $region61: #{tpu_custom_call.1} parent=0
    _
  %s5 = ssub.s32 1, %s3
  %s6 = scalar_select 0, %s5, %s3
  $region1: #{tpu_custom_call.1} parent=0
    #allocation6 [shape = 'u8[8192]{0}', space=vmem, size = 0x2000, scoped, tag = 'input window, operand 0']
    #allocation7 [shape = 's32[2]{0}', space=sflag, size = 0x8, scoped, tag = 'scoped memory for tpu_custom_call.1']
    #allocation8 [shape = 's32[2]{0}', space=sflag, size = 0x8, scoped, tag = 'scoped memory for tpu_custom_call.1']
    #allocation9 [shape = 's32[2]{0}', space=sflag, size = 0x8, scoped, tag = 'scoped memory for tpu_custom_call.1']
    #allocation10 [shape = 'u8[512]{0}', space=smem, size = 0x200, scoped, tag = 'input window, operand 1, single buffered']
    #allocation11 [shape = 'u8[16384]{0}', space=vmem, size = 0x4000, scoped, tag = 'output window, operand 0']
    %7 = vsyncpa [#allocation7], 0
    %s8 = scalar_lea.sflag [#allocation7], 1
    %9 = vsyncpa %s8, 0
    %10 = vsyncpa [#allocation9], 0
    %11 = vsyncpa [#allocation8], 0
    %s12 = scalar_lea.sflag [#allocation8], 1
    %13 = vsyncpa %s12, 0
    loop: start=0, step=1, limit=4
    $region2: #{tpu_custom_call.1} parent=1 // loop_pre_header
      _
    $region3: #{tpu_custom_call.1} parent=1 // loop_header
      %s15 = sphi 0, %s19
      %p16 = scmp.ge.s32.totalorder %s15, 4
      %s22 = sphi 0, %s34
      %s23 = sphi 0, %s30
      %s24 = sphi 0, %s22
      %s25 = sphi 0, %s23
      %s26 = sphi 0, %s24
      %s27 = sphi 0, %s25
      %s39 = sphi 0, %s41
      %s42 = sphi 0, %s39
      %s43 = sphi 0, %s42
      %s59 = sphi 0, %s43
      %s63 = sphi 0, %s63
      %s65 = sphi 0, %s63
      %s66 = sphi 0, %s65
      %s80 = sphi 0, %s66
      %s86 = sphi 0, %s88
      %s89 = sphi 0, %s86
      %s90 = sphi 0, %s89
      %s106 = sphi 0, %s90
    $region4: #{tpu_custom_call.1} parent=1 // loop_header_branch
      %18 = sbr.rel (%p16) target = $region8
    $region5: #{tpu_custom_call.1} parent=1 // loop_body
      %s20 = ssub.s32 %s15, 1
      %s21 = ssub.s32 %s15, 2
      %s28 = sadd.s32 1, %s23
      %p29 = scmp.ge.s32.totalorder %s28, 1
      %s30 = scalar_select %p29, 0, %s28
      %s31 = sadd.s32 1, %s22
      %s32 = scalar_select %p29, %s31, %s22
      %p33 = scmp.ge.s32.totalorder %s32, 2
      %s34 = scalar_select %p33, 0, %s32
      %s35 = ssub.s32 %s22, %s34
      %s36 = ssub.s32 %s23, %s30
      %s37 = sor.u32 %s35, %s36
      %p38 = scmp.eq.s32.totalorder %s37, 0
      %s40 = sadd.s32 %s39, 1
      %s41 = scalar_select %p38, %s39, %s40
      %p44 = pneg %p38
      %p45 = scmp.eq.s32.totalorder %s15, 1
      %p46 = por %p44, %p45
      %p47 = scmp.ne.s32.totalorder %s39, %s42
      %p48 = scmp.eq.s32.totalorder %s15, 0
      %p49 = por %p47, %p48
      %p50 = scmp.ne.s32.totalorder %s39, %s42
      %p51 = scmp.eq.s32.totalorder %s20, 1
      %p52 = por %p50, %p51
      %p53 = scmp.ne.s32.totalorder %s42, %s43
      %p54 = scmp.eq.s32.totalorder %s20, 0
      %p55 = por %p53, %p54
      %p56 = scmp.ne.s32.totalorder %s42, %s43
      %p57 = scmp.eq.s32.totalorder %s21, 1
      %p58 = por %p56, %p57
      %p60 = scmp.ne.s32.totalorder %s43, %s59
      %p61 = scmp.eq.s32.totalorder %s21, 0
      %p62 = por %p60, %p61
      %s64 = sadd.s32 %s63, 1
      %p67 = scmp.eq.s32.totalorder %s15, 1
      %p68 = scmp.ne.s32.totalorder %s63, %s65
      %p69 = scmp.eq.s32.totalorder %s15, 0
      %p70 = por %p68, %p69
      %p71 = scmp.ne.s32.totalorder %s63, %s65
      %p72 = scmp.eq.s32.totalorder %s20, 1
      %p73 = por %p71, %p72
      %p74 = scmp.ne.s32.totalorder %s65, %s66
      %p75 = scmp.eq.s32.totalorder %s20, 0
      %p76 = por %p74, %p75
      %p77 = scmp.ne.s32.totalorder %s65, %s66
      %p78 = scmp.eq.s32.totalorder %s21, 1
      %p79 = por %p77, %p78
      %p81 = scmp.ne.s32.totalorder %s66, %s80
      %p82 = scmp.eq.s32.totalorder %s21, 0
      %p83 = por %p81, %p82
      %s84 = ssub.s32 %s22, %s34
      %p85 = scmp.eq.s32.totalorder %s84, 0
      %s87 = sadd.s32 %s86, 1
      %s88 = scalar_select %p85, %s86, %s87
      %p91 = pneg %p85
      %p92 = scmp.eq.s32.totalorder %s15, 1
      %p93 = por %p91, %p92
      %p94 = scmp.ne.s32.totalorder %s86, %s89
      %p95 = scmp.eq.s32.totalorder %s15, 0
      %p96 = por %p94, %p95
      %p97 = scmp.ne.s32.totalorder %s86, %s89
      %p98 = scmp.eq.s32.totalorder %s20, 1
      %p99 = por %p97, %p98
      %p100 = scmp.ne.s32.totalorder %s89, %s90
      %p101 = scmp.eq.s32.totalorder %s20, 0
      %p102 = por %p100, %p101
      %p103 = scmp.ne.s32.totalorder %s89, %s90
      %p104 = scmp.eq.s32.totalorder %s21, 1
      %p105 = por %p103, %p104
      %p107 = scmp.ne.s32.totalorder %s90, %s106
      %p108 = scmp.eq.s32.totalorder %s21, 0
      %p109 = por %p107, %p108
      %p110 = scmp.le.s32.totalorder 1, %s15
      %p111 = scmp.lt.s32.totalorder %s15, 3
      %p112 = pnand %p110, %p111
      %p113 = pneg %p112
      // Predicated region
      $region9: #{tpu_custom_call.1} parent=5 // pred_check
        _
      $region10: #{tpu_custom_call.1} parent=5 // pred_check_branch
        %115 = sbr.rel (%p112) target = $region12
      $region11: #{tpu_custom_call.1} parent=5 // pred_region
        %s116 = ssub.s32 %s15, 1
        // Predicated region
        $region13: #{tpu_custom_call.1} parent=11 // pred_check
          %p117 = pneg %p76
        $region14: #{tpu_custom_call.1} parent=11 // pred_check_branch
          %119 = sbr.rel (%p117) target = $region16
        $region15: #{tpu_custom_call.1} parent=11 // pred_region
          %s121 = ssub.s32 16, 16
          %122 = vsyncadd [#allocation9], %s121
          %s124 = sshll.u32 %s1, 4
          %s125 = int_to_ptr.vmem [resolvable:$true] %s124
          %127 = dma.vmem_to_smem %s125, 16, [#allocation10], [#allocation9]
        $region16: #{tpu_custom_call.1} parent=11 // pred_fallthru
          _
      $region12: #{tpu_custom_call.1} parent=5 // pred_fallthru
        _
      %p128 = scmp.lt.s32.totalorder %s15, 2
      // Predicated region
      $region17: #{tpu_custom_call.1} parent=5 // pred_check
        %p129 = pneg %p128
      $region18: #{tpu_custom_call.1} parent=5 // pred_check_branch
        %131 = sbr.rel (%p129) target = $region20
      $region19: #{tpu_custom_call.1} parent=5 // pred_region
        // Predicated region
        $region21: #{tpu_custom_call.1} parent=19 // pred_check
          %p132 = pneg %p49
        $region22: #{tpu_custom_call.1} parent=19 // pred_check_branch
          %134 = sbr.rel (%p132) target = $region24
        $region23: #{tpu_custom_call.1} parent=19 // pred_region
          %s135 = sand.u32 %s39, 1
          %s136 = scalar_lea.sflag [#allocation7], %s135
          %s137 = sand.u32 %s39, 1
          %s138 = smul.addr %s137, 8
          %s139 = scalar_lea.vmem [#allocation6], %s138
          %s141 = ssub.s32 128, 128
          %142 = vsyncadd %s136, %s141
          %s143 = smul.addr %s23, 2
          %s144 = smul.addr %s22, 2
          %s145 = sadd.s32 %s143, %s144
          %s146 = smul.addr %s145, 64
          %s147 = scalar_lea.hbm %s0, %s146
          %s149 = sshll.u32 %s139, 4
          %s150 = int_to_ptr.vmem [resolvable:$true] %s149
          %152 = dma.hbm_to_vmem [thread:$0]  %s147, 128, %s150, %s136
        $region24: #{tpu_custom_call.1} parent=19 // pred_fallthru
          _
      $region20: #{tpu_custom_call.1} parent=5 // pred_fallthru
        _
      %p153 = scmp.le.s32.totalorder 1, %s15
      %p154 = scmp.lt.s32.totalorder %s15, 3
      %p155 = pnand %p153, %p154
      %p156 = pneg %p155
      // Predicated region
      $region25: #{tpu_custom_call.1} parent=5 // pred_check
        _
      $region26: #{tpu_custom_call.1} parent=5 // pred_check_branch
        %158 = sbr.rel (%p155) target = $region28
      $region27: #{tpu_custom_call.1} parent=5 // pred_region
        %s159 = ssub.s32 %s15, 1
        %s160 = sand.u32 %s42, 1
        %s161 = scalar_lea.sflag [#allocation7], %s160
        %s162 = sand.u32 %s42, 1
        %s163 = smul.addr %s162, 8
        %s164 = scalar_lea.vmem [#allocation6], %s163
        // Predicated region
        $region29: #{tpu_custom_call.1} parent=27 // pred_check
          %p165 = pneg %p55
        $region30: #{tpu_custom_call.1} parent=27 // pred_check_branch
          %167 = sbr.rel (%p165) target = $region32
        $region31: #{tpu_custom_call.1} parent=27 // pred_region
          %168 = dma.done %s161, 128
        $region32: #{tpu_custom_call.1} parent=27 // pred_fallthru
          _
        // Predicated region
        $region33: #{tpu_custom_call.1} parent=27 // pred_check
          %p169 = pneg %p76
        $region34: #{tpu_custom_call.1} parent=27 // pred_check_branch
          %171 = sbr.rel (%p169) target = $region36
        $region35: #{tpu_custom_call.1} parent=27 // pred_region
          %172 = dma.done [#allocation9], 16
        $region36: #{tpu_custom_call.1} parent=27 // pred_fallthru
          _
        %173 = sfence
        %s174 = sand.u32 %s42, 1
        %s175 = scalar_lea.sflag [#allocation7], %s174
        %s176 = sand.u32 %s42, 1
        %s177 = smul.addr %s176, 8
        %s178 = scalar_lea.vmem [#allocation6], %s177
        %p179 = pneg %p55
        %p180 = pneg %p52
        %p181 = pneg %p76
        %p182 = pneg %p73
        %p183 = pneg %p102
        %p184 = pneg %p99
        %s185 = sand.u32 %s89, 1
        %s186 = scalar_lea.sflag [#allocation8], %s185
        %s187 = sand.u32 %s89, 1
        %s188 = smul.addr %s187, 16
        %s189 = scalar_lea.vmem [#allocation11], %s188
        %v190 = vld [vmem:[%s164] sm:$0xff]
        %v192 = vcombine.high %v190, %v190
        %vm194 = vcmask 1043456
        %v195 = vsel %vm194, %v190, 0.0
        %v196 = vrot.slane %v195, 4
        %v197 = vadd.f32 %v195, %v196
        %v198 = vrot.slane %v197, 2
        %v199 = vadd.f32 %v197, %v198
        %v200 = vrot.slane %v199, 1
        %v201 = vadd.f32 %v199, %v200
        %v202 = vsel %vm194, %v192, 0.0
        %v203 = vrot.slane %v202, 4
        %v204 = vadd.f32 %v202, %v203
        %v205 = vrot.slane %v204, 2
        %v206 = vadd.f32 %v204, %v205
        %v207 = vrot.slane %v206, 1
        %v208 = vadd.f32 %v206, %v207
        %v209 = vsel %vm194, %v190, -inf
        %v210 = vrot.slane %v209, 4
        %v211 = vmax.f32 %v209, %v210
        %v212 = vrot.slane %v211, 2
        %v213 = vmax.f32 %v211, %v212
        %v214 = vrot.slane %v213, 1
        %v215 = vmax.f32 %v213, %v214
        %v216 = vsel %vm194, %v192, -inf
        %v217 = vrot.slane %v216, 4
        %v218 = vmax.f32 %v216, %v217
        %v219 = vrot.slane %v218, 2
        %v220 = vmax.f32 %v218, %v219
        %v221 = vrot.slane %v220, 1
        %v222 = vmax.f32 %v220, %v221
        %p223 = scmp.eq.s32.totalorder %s25, 0
        // Predicated region
        $region37: #{tpu_custom_call.1} parent=27 // pred_check
          %p224 = pneg %p223
        $region38: #{tpu_custom_call.1} parent=27 // pred_check_branch
          %226 = sbr.rel (%p224) target = $region40
        $region39: #{tpu_custom_call.1} parent=27 // pred_region
          %v229 = vcombine.low %v201, %v208
          %v231 = vunpack.c.l.s4 1966171168
          %v232 = vunpack.c.0.s8 %v231
          %v233 = vlaneseq
          %v234 = vshrl.u32 %v233, 7
          %v235 = vsub.s32 %v232, %v234
          %v236 = vrot.slane %v229, %v235
          %v238 = vunpack.c.l.s4 1966171168
          %v239 = vunpack.c.0.s8 %v238
          %v240 = vlaneseq
          %v241 = vshrl.u32 %v240, 7
          %v242 = vsub.s32 %v239, %v241
          %v243 = vrot.slane %v236, %v242
          %v245 = vlaneseq
          %vm246 = vcmp.ge.s32.totalorder %v245, 0
          %vm247 = vcmp.lt.s32.totalorder %v245, 256
          %vm248 = vmand %vm246, %vm247
          %249 = vst.msk [vmem:[#allocation2] sm:$0x3] %vm248, %v243
          %v252 = vcombine.low %v215, %v222
          %v254 = vunpack.c.l.s4 1966171168
          %v255 = vunpack.c.0.s8 %v254
          %v256 = vlaneseq
          %v257 = vshrl.u32 %v256, 7
          %v258 = vsub.s32 %v255, %v257
          %v259 = vrot.slane %v252, %v258
          %v261 = vunpack.c.l.s4 1966171168
          %v262 = vunpack.c.0.s8 %v261
          %v263 = vlaneseq
          %v264 = vshrl.u32 %v263, 7
          %v265 = vsub.s32 %v262, %v264
          %v266 = vrot.slane %v259, %v265
          %268 = vst.msk [vmem:[#allocation3] sm:$0x3] %vm248, %v266
        $region40: #{tpu_custom_call.1} parent=27 // pred_fallthru
          _
        %p269 = scmp.gt.s32.totalorder %s25, 0
        // Predicated region
        $region41: #{tpu_custom_call.1} parent=27 // pred_check
          %p270 = pneg %p269
        $region42: #{tpu_custom_call.1} parent=27 // pred_check_branch
          %272 = sbr.rel (%p270) target = $region44
        $region43: #{tpu_custom_call.1} parent=27 // pred_region
          %v273 = vld [vmem:[#allocation2] sm:$0x3]
          %v276 = vcombine.low %v201, %v208
          %v278 = vunpack.c.l.s4 1966171168
          %v279 = vunpack.c.0.s8 %v278
          %v280 = vlaneseq
          %v281 = vshrl.u32 %v280, 7
          %v282 = vsub.s32 %v279, %v281
          %v283 = vrot.slane %v276, %v282
          %v285 = vunpack.c.l.s4 1966171168
          %v286 = vunpack.c.0.s8 %v285
          %v287 = vlaneseq
          %v288 = vshrl.u32 %v287, 7
          %v289 = vsub.s32 %v286, %v288
          %v290 = vrot.slane %v283, %v289
          %v292 = vadd.f32 %v273, %v290
          %v293 = vlaneseq
          %vm294 = vcmp.ge.s32.totalorder %v293, 0
          %vm295 = vcmp.lt.s32.totalorder %v293, 256
          %vm296 = vmand %vm294, %vm295
          %297 = vst.msk [vmem:[#allocation2] sm:$0x3] %vm296, %v292
          %v298 = vld [vmem:[#allocation3] sm:$0x3]
          %v301 = vcombine.low %v215, %v222
          %v303 = vunpack.c.l.s4 1966171168
          %v304 = vunpack.c.0.s8 %v303
          %v305 = vlaneseq
          %v306 = vshrl.u32 %v305, 7
          %v307 = vsub.s32 %v304, %v306
          %v308 = vrot.slane %v301, %v307
          %v310 = vunpack.c.l.s4 1966171168
          %v311 = vunpack.c.0.s8 %v310
          %v312 = vlaneseq
          %v313 = vshrl.u32 %v312, 7
          %v314 = vsub.s32 %v311, %v313
          %v315 = vrot.slane %v308, %v314
          %v317 = vmax.f32 %v298, %v315
          %318 = vst.msk [vmem:[#allocation3] sm:$0x3] %vm296, %v317
        $region44: #{tpu_custom_call.1} parent=27 // pred_fallthru
          _
        // Predicated region
        $region45: #{tpu_custom_call.1} parent=27 // pred_check
          %p319 = pneg %p223
        $region46: #{tpu_custom_call.1} parent=27 // pred_check_branch
          %321 = sbr.rel (%p319) target = $region48
        $region47: #{tpu_custom_call.1} parent=27 // pred_region
          %vm322 = vcmask 179200
          %323 = vst.msk [vmem:[#allocation4] sm:$0xff] %vm322, 0.0
          %324 = vst.msk [vmem:[#allocation4 + $0x8] sm:$0xff] %vm322, 0.0
          %vm325 = vcmask 177152
          %326 = vst.msk [vmem:[#allocation4 + $0x10] sm:$0x3f] %vm325, 0.0
          %327 = vst.msk [vmem:[#allocation5] sm:$0xff] %vm322, 0.0
          %328 = vst.msk [vmem:[#allocation5 + $0x8] sm:$0xff] %vm322, 0.0
          %329 = vst.msk [vmem:[#allocation5 + $0x10] sm:$0x3f] %vm325, 0.0
          %v330 = vld [vmem:[#allocation2] sm:$0x1]
          %v332 = vlaneseq
          %v333 = vshrl.u32 %v332, 7
          %v334 = vsub.s32 0, %v333
          %v335 = vrot.slane %v330, %v334
          %336 = vrot.lane.b32.xlu0 %v335, 3
          %v337 = vpop.permute.xlu0 %336
          %vm339 = vcmask 147480
          %340 = vst.msk [vmem:[#allocation4 + $0x3] sm:$0x1] %vm339, %v337
          %v341 = vld [vmem:[#allocation3] sm:$0x1]
          %v343 = vlaneseq
          %v344 = vshrl.u32 %v343, 7
          %v345 = vsub.s32 0, %v344
          %v346 = vrot.slane %v341, %v345
          %347 = vrot.lane.b32.xlu0 %v346, 3
          %v348 = vpop.permute.xlu0 %347
          %350 = vst.msk [vmem:[#allocation5 + $0x3] sm:$0x1] %vm339, %v348
          %v351 = vld [vmem:[#allocation2] sm:$0x1]
          %v353 = vlaneseq
          %v354 = vshrl.u32 %v353, 7
          %v355 = vsub.s32 0, %v354
          %v356 = vrot.slane %v351, %v355
          %357 = vrot.lane.b32.xlu0 %v356, 115
          %v358 = vpop.permute.xlu0 %357
          %360 = vst.msk [vmem:[#allocation4 + $0x4] sm:$0x1] %vm339, %v358
          %v361 = vld [vmem:[#allocation3] sm:$0x1]
          %v363 = vlaneseq
          %v364 = vshrl.u32 %v363, 7
          %v365 = vsub.s32 0, %v364
          %v366 = vrot.slane %v361, %v365
          %367 = vrot.lane.b32.xlu0 %v366, 115
          %v368 = vpop.permute.xlu0 %367
          %370 = vst.msk [vmem:[#allocation5 + $0x4] sm:$0x1] %vm339, %v368
          %v371 = vld [vmem:[#allocation2] sm:$0x1]
          %v373 = vlaneseq
          %v374 = vshrl.u32 %v373, 7
          %v375 = vsub.s32 0, %v374
          %v376 = vrot.slane %v371, %v375
          %377 = vrot.lane.b32.xlu0 %v376, 99
          %v378 = vpop.permute.xlu0 %377
          %380 = vst.msk [vmem:[#allocation4 + $0x5] sm:$0x1] %vm339, %v378
          %v381 = vld [vmem:[#allocation3] sm:$0x1]
          %v383 = vlaneseq
          %v384 = vshrl.u32 %v383, 7
          %v385 = vsub.s32 0, %v384
          %v386 = vrot.slane %v381, %v385
          %387 = vrot.lane.b32.xlu0 %v386, 99
          %v388 = vpop.permute.xlu0 %387
          %390 = vst.msk [vmem:[#allocation5 + $0x5] sm:$0x1] %vm339, %v388
          %v391 = vld [vmem:[#allocation2] sm:$0x1]
          %v393 = vlaneseq
          %v394 = vshrl.u32 %v393, 7
          %v395 = vsub.s32 0, %v394
          %v396 = vrot.slane %v391, %v395
          %397 = vrot.lane.b32.xlu0 %v396, 83
          %v398 = vpop.permute.xlu0 %397
          %400 = vst.msk [vmem:[#allocation4 + $0x6] sm:$0x1] %vm339, %v398
          %v401 = vld [vmem:[#allocation3] sm:$0x1]
          %v403 = vlaneseq
          %v404 = vshrl.u32 %v403, 7
          %v405 = vsub.s32 0, %v404
          %v406 = vrot.slane %v401, %v405
          %407 = vrot.lane.b32.xlu0 %v406, 83
          %v408 = vpop.permute.xlu0 %407
          %410 = vst.msk [vmem:[#allocation5 + $0x6] sm:$0x1] %vm339, %v408
          %v411 = vld [vmem:[#allocation2] sm:$0x1]
          %v413 = vlaneseq
          %v414 = vshrl.u32 %v413, 7
          %v415 = vsub.s32 0, %v414
          %v416 = vrot.slane %v411, %v415
          %417 = vrot.lane.b32.xlu0 %v416, 67
          %v418 = vpop.permute.xlu0 %417
          %420 = vst.msk [vmem:[#allocation4 + $0x7] sm:$0x1] %vm339, %v418
          %v421 = vld [vmem:[#allocation3] sm:$0x1]
          %v423 = vlaneseq
          %v424 = vshrl.u32 %v423, 7
          %v425 = vsub.s32 0, %v424
          %v426 = vrot.slane %v421, %v425
          %427 = vrot.lane.b32.xlu0 %v426, 67
          %v428 = vpop.permute.xlu0 %427
          %430 = vst.msk [vmem:[#allocation5 + $0x7] sm:$0x1] %vm339, %v428
          %v431 = vld [vmem:[#allocation2] sm:$0x1]
          %v433 = vlaneseq
          %v434 = vshrl.u32 %v433, 7
          %v435 = vsub.s32 0, %v434
          %v436 = vrot.slane %v431, %v435
          %437 = vrot.lane.b32.xlu0 %v436, 51
          %v438 = vpop.permute.xlu0 %437
          %440 = vst.msk [vmem:[#allocation4 + $0x8] sm:$0x1] %vm339, %v438
          %v441 = vld [vmem:[#allocation3] sm:$0x1]
          %v443 = vlaneseq
          %v444 = vshrl.u32 %v443, 7
          %v445 = vsub.s32 0, %v444
          %v446 = vrot.slane %v441, %v445
          %447 = vrot.lane.b32.xlu0 %v446, 51
          %v448 = vpop.permute.xlu0 %447
          %450 = vst.msk [vmem:[#allocation5 + $0x8] sm:$0x1] %vm339, %v448
          %v451 = vld [vmem:[#allocation2] sm:$0x1]
          %v453 = vlaneseq
          %v454 = vshrl.u32 %v453, 7
          %v455 = vsub.s32 0, %v454
          %v456 = vrot.slane %v451, %v455
          %457 = vrot.lane.b32.xlu0 %v456, 35
          %v458 = vpop.permute.xlu0 %457
          %460 = vst.msk [vmem:[#allocation4 + $0x9] sm:$0x1] %vm339, %v458
          %v461 = vld [vmem:[#allocation3] sm:$0x1]
          %v463 = vlaneseq
          %v464 = vshrl.u32 %v463, 7
          %v465 = vsub.s32 0, %v464
          %v466 = vrot.slane %v461, %v465
          %467 = vrot.lane.b32.xlu0 %v466, 35
          %v468 = vpop.permute.xlu0 %467
          %470 = vst.msk [vmem:[#allocation5 + $0x9] sm:$0x1] %vm339, %v468
          %v471 = vld [vmem:[#allocation2] sm:$0x1]
          %v473 = vlaneseq
          %v474 = vshrl.u32 %v473, 7
          %v475 = vsub.s32 0, %v474
          %v476 = vrot.slane %v471, %v475
          %477 = vrot.lane.b32.xlu0 %v476, 19
          %v478 = vpop.permute.xlu0 %477
          %480 = vst.msk [vmem:[#allocation4 + $0xa] sm:$0x1] %vm339, %v478
          %v481 = vld [vmem:[#allocation3] sm:$0x1]
          %v483 = vlaneseq
          %v484 = vshrl.u32 %v483, 7
          %v485 = vsub.s32 0, %v484
          %v486 = vrot.slane %v481, %v485
          %487 = vrot.lane.b32.xlu0 %v486, 19
          %v488 = vpop.permute.xlu0 %487
          %490 = vst.msk [vmem:[#allocation5 + $0xa] sm:$0x1] %vm339, %v488
          %v491 = vld [vmem:[#allocation2 + $0x1] sm:$0x1]
          %v493 = vlaneseq
          %v494 = vshrl.u32 %v493, 7
          %v495 = vsub.s32 0, %v494
          %v496 = vrot.slane %v491, %v495
          %497 = vrot.lane.b32.xlu0 %v496, 3
          %v498 = vpop.permute.xlu0 %497
          %500 = vst.msk [vmem:[#allocation4 + $0xb] sm:$0x1] %vm339, %v498
          %v501 = vld [vmem:[#allocation3 + $0x1] sm:$0x1]
          %v503 = vlaneseq
          %v504 = vshrl.u32 %v503, 7
          %v505 = vsub.s32 0, %v504
          %v506 = vrot.slane %v501, %v505
          %507 = vrot.lane.b32.xlu0 %v506, 3
          %v508 = vpop.permute.xlu0 %507
          %510 = vst.msk [vmem:[#allocation5 + $0xb] sm:$0x1] %vm339, %v508
          %v511 = vld [vmem:[#allocation2 + $0x1] sm:$0x1]
          %v513 = vlaneseq
          %v514 = vshrl.u32 %v513, 7
          %v515 = vsub.s32 0, %v514
          %v516 = vrot.slane %v511, %v515
          %517 = vrot.lane.b32.xlu0 %v516, 115
          %v518 = vpop.permute.xlu0 %517
          %520 = vst.msk [vmem:[#allocation4 + $0xc] sm:$0x1] %vm339, %v518
          %v521 = vld [vmem:[#allocation3 + $0x1] sm:$0x1]
          %v523 = vlaneseq
          %v524 = vshrl.u32 %v523, 7
          %v525 = vsub.s32 0, %v524
          %v526 = vrot.slane %v521, %v525
          %527 = vrot.lane.b32.xlu0 %v526, 115
          %v528 = vpop.permute.xlu0 %527
          %530 = vst.msk [vmem:[#allocation5 + $0xc] sm:$0x1] %vm339, %v528
          %v531 = vld [vmem:[#allocation2 + $0x1] sm:$0x1]
          %v533 = vlaneseq
          %v534 = vshrl.u32 %v533, 7
          %v535 = vsub.s32 0, %v534
          %v536 = vrot.slane %v531, %v535
          %537 = vrot.lane.b32.xlu0 %v536, 99
          %v538 = vpop.permute.xlu0 %537
          %540 = vst.msk [vmem:[#allocation4 + $0xd] sm:$0x1] %vm339, %v538
          %v541 = vld [vmem:[#allocation3 + $0x1] sm:$0x1]
          %v543 = vlaneseq
          %v544 = vshrl.u32 %v543, 7
          %v545 = vsub.s32 0, %v544
          %v546 = vrot.slane %v541, %v545
          %547 = vrot.lane.b32.xlu0 %v546, 99
          %v548 = vpop.permute.xlu0 %547
          %550 = vst.msk [vmem:[#allocation5 + $0xd] sm:$0x1] %vm339, %v548
          %v551 = vld [vmem:[#allocation2 + $0x1] sm:$0x1]
          %v553 = vlaneseq
          %v554 = vshrl.u32 %v553, 7
          %v555 = vsub.s32 0, %v554
          %v556 = vrot.slane %v551, %v555
          %557 = vrot.lane.b32.xlu0 %v556, 83
          %v558 = vpop.permute.xlu0 %557
          %560 = vst.msk [vmem:[#allocation4 + $0xe] sm:$0x1] %vm339, %v558
          %v561 = vld [vmem:[#allocation3 + $0x1] sm:$0x1]
          %v563 = vlaneseq
          %v564 = vshrl.u32 %v563, 7
          %v565 = vsub.s32 0, %v564
          %v566 = vrot.slane %v561, %v565
          %567 = vrot.lane.b32.xlu0 %v566, 83
          %v568 = vpop.permute.xlu0 %567
          %570 = vst.msk [vmem:[#allocation5 + $0xe] sm:$0x1] %vm339, %v568
          %v571 = vld [vmem:[#allocation2 + $0x1] sm:$0x1]
          %v573 = vlaneseq
          %v574 = vshrl.u32 %v573, 7
          %v575 = vsub.s32 0, %v574
          %v576 = vrot.slane %v571, %v575
          %577 = vrot.lane.b32.xlu0 %v576, 67
          %v578 = vpop.permute.xlu0 %577
          %580 = vst.msk [vmem:[#allocation4 + $0xf] sm:$0x1] %vm339, %v578
          %v581 = vld [vmem:[#allocation3 + $0x1] sm:$0x1]
          %v583 = vlaneseq
          %v584 = vshrl.u32 %v583, 7
          %v585 = vsub.s32 0, %v584
          %v586 = vrot.slane %v581, %v585
          %587 = vrot.lane.b32.xlu0 %v586, 67
          %v588 = vpop.permute.xlu0 %587
          %590 = vst.msk [vmem:[#allocation5 + $0xf] sm:$0x1] %vm339, %v588
          %v591 = vld [vmem:[#allocation2 + $0x1] sm:$0x1]
          %v593 = vlaneseq
          %v594 = vshrl.u32 %v593, 7
          %v595 = vsub.s32 0, %v594
          %v596 = vrot.slane %v591, %v595
          %597 = vrot.lane.b32.xlu0 %v596, 51
          %v598 = vpop.permute.xlu0 %597
          %600 = vst.msk [vmem:[#allocation4 + $0x10] sm:$0x1] %vm339, %v598
          %v601 = vld [vmem:[#allocation3 + $0x1] sm:$0x1]
          %v603 = vlaneseq
          %v604 = vshrl.u32 %v603, 7
          %v605 = vsub.s32 0, %v604
          %v606 = vrot.slane %v601, %v605
          %607 = vrot.lane.b32.xlu0 %v606, 51
          %v608 = vpop.permute.xlu0 %607
          %610 = vst.msk [vmem:[#allocation5 + $0x10] sm:$0x1] %vm339, %v608
          %v611 = vld [vmem:[#allocation2 + $0x1] sm:$0x1]
          %v613 = vlaneseq
          %v614 = vshrl.u32 %v613, 7
          %v615 = vsub.s32 0, %v614
          %v616 = vrot.slane %v611, %v615
          %617 = vrot.lane.b32.xlu0 %v616, 35
          %v618 = vpop.permute.xlu0 %617
          %620 = vst.msk [vmem:[#allocation4 + $0x11] sm:$0x1] %vm339, %v618
          %v621 = vld [vmem:[#allocation3 + $0x1] sm:$0x1]
          %v623 = vlaneseq
          %v624 = vshrl.u32 %v623, 7
          %v625 = vsub.s32 0, %v624
          %v626 = vrot.slane %v621, %v625
          %627 = vrot.lane.b32.xlu0 %v626, 35
          %v628 = vpop.permute.xlu0 %627
          %630 = vst.msk [vmem:[#allocation5 + $0x11] sm:$0x1] %vm339, %v628
          %v631 = vld [vmem:[#allocation2 + $0x1] sm:$0x1]
          %v633 = vlaneseq
          %v634 = vshrl.u32 %v633, 7
          %v635 = vsub.s32 0, %v634
          %v636 = vrot.slane %v631, %v635
          %637 = vrot.lane.b32.xlu0 %v636, 19
          %v638 = vpop.permute.xlu0 %637
          %640 = vst.msk [vmem:[#allocation4 + $0x12] sm:$0x1] %vm339, %v638
          %v641 = vld [vmem:[#allocation3 + $0x1] sm:$0x1]
          %v643 = vlaneseq
          %v644 = vshrl.u32 %v643, 7
          %v645 = vsub.s32 0, %v644
          %v646 = vrot.slane %v641, %v645
          %647 = vrot.lane.b32.xlu0 %v646, 19
          %v648 = vpop.permute.xlu0 %647
          %650 = vst.msk [vmem:[#allocation5 + $0x12] sm:$0x1] %vm339, %v648
          %s651 = sld [smem:[#allocation10]]
          %s652 = sld [smem:[#allocation10 + $0x31]]
          %v653 = vld [vmem:[#allocation4] sm:$0xff]
          %v654 = vld [vmem:[#allocation4 + $0x8] sm:$0xff]
          %v655 = vld [vmem:[#allocation5] sm:$0xff]
          %v656 = vld [vmem:[#allocation5 + $0x8] sm:$0xff]
          %v657 = vstv %s651
          %v658 = vmul.f32 %v657, %v653
          %v659 = vmul.f32 %v657, %v654
          %v660 = vadd.f32 %v658, 0.0
          %v661 = vadd.f32 %v659, 0.0
          %v662 = vstv %s652
          %v663 = vmul.f32 %v662, %v655
          %v664 = vmul.f32 %v662, %v656
          %v665 = vadd.f32 %v663, 0.0
          %v666 = vadd.f32 %v664, 0.0
          %s667 = sld [smem:[#allocation10 + $0x1]]
          %s668 = sld [smem:[#allocation10 + $0x32]]
          %v669 = vstv %s667
          %v670 = vmul.f32 %v669, %v653
          %v671 = vmul.f32 %v669, %v654
          %v672 = vadd.f32 %v670, 0.0
          %v673 = vadd.f32 %v671, 0.0
          %v674 = vstv %s668
          %v675 = vmul.f32 %v674, %v655
          %v676 = vmul.f32 %v674, %v656
          %v677 = vadd.f32 %v675, 0.0
          %v678 = vadd.f32 %v676, 0.0
          %s679 = sld [smem:[#allocation10 + $0x2]]
          %s680 = sld [smem:[#allocation10 + $0x33]]
          %v681 = vstv %s679
          %v682 = vmul.f32 %v681, %v653
          %v683 = vmul.f32 %v681, %v654
          %686 = vrot.lane.b32.xlu0 %v682, 126
          %v687 = vpop.permute.xlu0 %686
          %688 = vrot.lane.b32.xlu0 %v683, 126
          %v689 = vpop.permute.xlu0 %688
          %v692 = vadd.f32 %v660, %v687
          %v693 = vadd.f32 %v661, %v689
          %v694 = vstv %s680
          %v695 = vmul.f32 %v694, %v655
          %v696 = vmul.f32 %v694, %v656
          %699 = vrot.lane.b32.xlu0 %v695, 126
          %v700 = vpop.permute.xlu0 %699
          %701 = vrot.lane.b32.xlu0 %v696, 126
          %v702 = vpop.permute.xlu0 %701
          %v705 = vadd.f32 %v665, %v700
          %v706 = vadd.f32 %v666, %v702
          %s707 = sld [smem:[#allocation10 + $0x3]]
          %s708 = sld [smem:[#allocation10 + $0x34]]
          %v709 = vstv %s707
          %v710 = vmul.f32 %v709, %v653
          %v711 = vmul.f32 %v709, %v654
          %714 = vrot.lane.b32.xlu0 %v710, 126
          %v715 = vpop.permute.xlu0 %714
          %716 = vrot.lane.b32.xlu0 %v711, 126
          %v717 = vpop.permute.xlu0 %716
          %v720 = vadd.f32 %v672, %v715
          %v721 = vadd.f32 %v673, %v717
          %v722 = vstv %s708
          %v723 = vmul.f32 %v722, %v655
          %v724 = vmul.f32 %v722, %v656
          %727 = vrot.lane.b32.xlu0 %v723, 126
          %v728 = vpop.permute.xlu0 %727
          %729 = vrot.lane.b32.xlu0 %v724, 126
          %v730 = vpop.permute.xlu0 %729
          %v733 = vadd.f32 %v677, %v728
          %v734 = vadd.f32 %v678, %v730
          %s735 = sld [smem:[#allocation10 + $0x4]]
          %s736 = sld [smem:[#allocation10 + $0x35]]
          %v737 = vstv %s735
          %v738 = vmul.f32 %v737, %v653
          %v739 = vmul.f32 %v737, %v654
          %742 = vrot.lane.b32.xlu0 %v738, 124
          %v743 = vpop.permute.xlu0 %742
          %744 = vrot.lane.b32.xlu0 %v739, 124
          %v745 = vpop.permute.xlu0 %744
          %v748 = vadd.f32 %v692, %v743
          %v749 = vadd.f32 %v693, %v745
          %v750 = vstv %s736
          %v751 = vmul.f32 %v750, %v655
          %v752 = vmul.f32 %v750, %v656
          %755 = vrot.lane.b32.xlu0 %v751, 124
          %v756 = vpop.permute.xlu0 %755
          %757 = vrot.lane.b32.xlu0 %v752, 124
          %v758 = vpop.permute.xlu0 %757
          %v761 = vadd.f32 %v705, %v756
          %v762 = vadd.f32 %v706, %v758
          %s763 = sld [smem:[#allocation10 + $0x5]]
          %s764 = sld [smem:[#allocation10 + $0x36]]
          %v765 = vstv %s763
          %v766 = vmul.f32 %v765, %v653
          %v767 = vmul.f32 %v765, %v654
          %770 = vrot.lane.b32.xlu0 %v766, 124
          %v771 = vpop.permute.xlu0 %770
          %772 = vrot.lane.b32.xlu0 %v767, 124
          %v773 = vpop.permute.xlu0 %772
          %v776 = vadd.f32 %v720, %v771
          %v777 = vadd.f32 %v721, %v773
          %v778 = vstv %s764
          %v779 = vmul.f32 %v778, %v655
          %v780 = vmul.f32 %v778, %v656
          %783 = vrot.lane.b32.xlu0 %v779, 124
          %v784 = vpop.permute.xlu0 %783
          %785 = vrot.lane.b32.xlu0 %v780, 124
          %v786 = vpop.permute.xlu0 %785
          %v789 = vadd.f32 %v733, %v784
          %v790 = vadd.f32 %v734, %v786
          %s791 = sld [smem:[#allocation10 + $0x6]]
          %s792 = sld [smem:[#allocation10 + $0x37]]
          %v793 = vstv %s791
          %v794 = vmul.f32 %v793, %v653
          %v795 = vmul.f32 %v793, %v654
          %798 = vrot.lane.b32.xlu0 %v794, 122
          %v799 = vpop.permute.xlu0 %798
          %800 = vrot.lane.b32.xlu0 %v795, 122
          %v801 = vpop.permute.xlu0 %800
          %v804 = vadd.f32 %v748, %v799
          %v805 = vadd.f32 %v749, %v801
          %v806 = vstv %s792
          %v807 = vmul.f32 %v806, %v655
          %v808 = vmul.f32 %v806, %v656
          %811 = vrot.lane.b32.xlu0 %v807, 122
          %v812 = vpop.permute.xlu0 %811
          %813 = vrot.lane.b32.xlu0 %v808, 122
          %v814 = vpop.permute.xlu0 %813
          %v817 = vadd.f32 %v761, %v812
          %v818 = vadd.f32 %v762, %v814
          %s819 = sld [smem:[#allocation10 + $0x7]]
          %s820 = sld [smem:[#allocation10 + $0x38]]
          %v821 = vld [vmem:[#allocation4 + $0x1] sm:$0xff]
          %v822 = vld [vmem:[#allocation4 + $0x9] sm:$0xff]
          %v823 = vld [vmem:[#allocation5 + $0x1] sm:$0xff]
          %v824 = vld [vmem:[#allocation5 + $0x9] sm:$0xff]
          %v825 = vstv %s819
          %v826 = vmul.f32 %v825, %v821
          %v827 = vmul.f32 %v825, %v822
          %830 = vrot.lane.b32.xlu0 %v826, 1
          %v831 = vpop.permute.xlu0 %830
          %832 = vrot.lane.b32.xlu0 %v827, 1
          %v833 = vpop.permute.xlu0 %832
          %v836 = vadd.f32 %v776, %v831
          %v837 = vadd.f32 %v777, %v833
          %v838 = vstv %s820
          %v839 = vmul.f32 %v838, %v823
          %v840 = vmul.f32 %v838, %v824
          %843 = vrot.lane.b32.xlu0 %v839, 1
          %v844 = vpop.permute.xlu0 %843
          %845 = vrot.lane.b32.xlu0 %v840, 1
          %v846 = vpop.permute.xlu0 %845
          %v849 = vadd.f32 %v789, %v844
          %v850 = vadd.f32 %v790, %v846
          %s851 = sld [smem:[#allocation10 + $0x8]]
          %s852 = sld [smem:[#allocation10 + $0x39]]
          %v853 = vstv %s851
          %v854 = vmul.f32 %v853, %v821
          %v855 = vmul.f32 %v853, %v822
          %858 = vrot.lane.b32.xlu0 %v854, 127
          %v859 = vpop.permute.xlu0 %858
          %860 = vrot.lane.b32.xlu0 %v855, 127
          %v861 = vpop.permute.xlu0 %860
          %v864 = vadd.f32 %v804, %v859
          %v865 = vadd.f32 %v805, %v861
          %v866 = vstv %s852
          %v867 = vmul.f32 %v866, %v823
          %v868 = vmul.f32 %v866, %v824
          %871 = vrot.lane.b32.xlu0 %v867, 127
          %v872 = vpop.permute.xlu0 %871
          %873 = vrot.lane.b32.xlu0 %v868, 127
          %v874 = vpop.permute.xlu0 %873
          %v877 = vadd.f32 %v817, %v872
          %v878 = vadd.f32 %v818, %v874
          %s879 = sld [smem:[#allocation10 + $0x9]]
          %s880 = sld [smem:[#allocation10 + $0x3a]]
          %v881 = vstv %s879
          %v882 = vmul.f32 %v881, %v821
          %v883 = vmul.f32 %v881, %v822
          %886 = vrot.lane.b32.xlu0 %v882, 127
          %v887 = vpop.permute.xlu0 %886
          %888 = vrot.lane.b32.xlu0 %v883, 127
          %v889 = vpop.permute.xlu0 %888
          %v892 = vadd.f32 %v836, %v887
          %v893 = vadd.f32 %v837, %v889
          %v894 = vstv %s880
          %v895 = vmul.f32 %v894, %v823
          %v896 = vmul.f32 %v894, %v824
          %899 = vrot.lane.b32.xlu0 %v895, 127
          %v900 = vpop.permute.xlu0 %899
          %901 = vrot.lane.b32.xlu0 %v896, 127
          %v902 = vpop.permute.xlu0 %901
          %v905 = vadd.f32 %v849, %v900
          %v906 = vadd.f32 %v850, %v902
          %s907 = sld [smem:[#allocation10 + $0xa]]
          %s908 = sld [smem:[#allocation10 + $0x3b]]
          %v909 = vstv %s907
          %v910 = vmul.f32 %v909, %v821
          %v911 = vmul.f32 %v909, %v822
          %914 = vrot.lane.b32.xlu0 %v910, 125
          %v915 = vpop.permute.xlu0 %914
          %916 = vrot.lane.b32.xlu0 %v911, 125
          %v917 = vpop.permute.xlu0 %916
          %v920 = vadd.f32 %v864, %v915
          %v921 = vadd.f32 %v865, %v917
          %v922 = vstv %s908
          %v923 = vmul.f32 %v922, %v823
          %v924 = vmul.f32 %v922, %v824
          %927 = vrot.lane.b32.xlu0 %v923, 125
          %v928 = vpop.permute.xlu0 %927
          %929 = vrot.lane.b32.xlu0 %v924, 125
          %v930 = vpop.permute.xlu0 %929
          %v933 = vadd.f32 %v877, %v928
          %v934 = vadd.f32 %v878, %v930
          %s935 = sld [smem:[#allocation10 + $0xb]]
          %s936 = sld [smem:[#allocation10 + $0x3c]]
          %v937 = vstv %s935
          %v938 = vmul.f32 %v937, %v821
          %v939 = vmul.f32 %v937, %v822
          %942 = vrot.lane.b32.xlu0 %v938, 125
          %v943 = vpop.permute.xlu0 %942
          %944 = vrot.lane.b32.xlu0 %v939, 125
          %v945 = vpop.permute.xlu0 %944
          %v948 = vadd.f32 %v892, %v943
          %v949 = vadd.f32 %v893, %v945
          %v950 = vstv %s936
          %v951 = vmul.f32 %v950, %v823
          %v952 = vmul.f32 %v950, %v824
          %955 = vrot.lane.b32.xlu0 %v951, 125
          %v956 = vpop.permute.xlu0 %955
          %957 = vrot.lane.b32.xlu0 %v952, 125
          %v958 = vpop.permute.xlu0 %957
          %v961 = vadd.f32 %v905, %v956
          %v962 = vadd.f32 %v906, %v958
          %s963 = sld [smem:[#allocation10 + $0xc]]
          %s964 = sld [smem:[#allocation10 + $0x3d]]
          %v965 = vstv %s963
          %v966 = vmul.f32 %v965, %v821
          %v967 = vmul.f32 %v965, %v822
          %970 = vrot.lane.b32.xlu0 %v966, 123
          %v971 = vpop.permute.xlu0 %970
          %972 = vrot.lane.b32.xlu0 %v967, 123
          %v973 = vpop.permute.xlu0 %972
          %v976 = vadd.f32 %v920, %v971
          %v977 = vadd.f32 %v921, %v973
          %v978 = vstv %s964
          %v979 = vmul.f32 %v978, %v823
          %v980 = vmul.f32 %v978, %v824
          %983 = vrot.lane.b32.xlu0 %v979, 123
          %v984 = vpop.permute.xlu0 %983
          %985 = vrot.lane.b32.xlu0 %v980, 123
          %v986 = vpop.permute.xlu0 %985
          %v989 = vadd.f32 %v933, %v984
          %v990 = vadd.f32 %v934, %v986
          %s991 = sld [smem:[#allocation10 + $0xd]]
          %s992 = sld [smem:[#allocation10 + $0x3e]]
          %v993 = vstv %s991
          %v994 = vmul.f32 %v993, %v821
          %v995 = vmul.f32 %v993, %v822
          %998 = vrot.lane.b32.xlu0 %v994, 123
          %v999 = vpop.permute.xlu0 %998
          %1000 = vrot.lane.b32.xlu0 %v995, 123
          %v1001 = vpop.permute.xlu0 %1000
          %v1004 = vadd.f32 %v948, %v999
          %v1005 = vadd.f32 %v949, %v1001
          %v1006 = vstv %s992
          %v1007 = vmul.f32 %v1006, %v823
          %v1008 = vmul.f32 %v1006, %v824
          %1011 = vrot.lane.b32.xlu0 %v1007, 123
          %v1012 = vpop.permute.xlu0 %1011
          %1013 = vrot.lane.b32.xlu0 %v1008, 123
          %v1014 = vpop.permute.xlu0 %1013
          %v1017 = vadd.f32 %v961, %v1012
          %v1018 = vadd.f32 %v962, %v1014
          %s1019 = sld [smem:[#allocation10 + $0xe]]
          %s1020 = sld [smem:[#allocation10 + $0x3f]]
          %v1021 = vld [vmem:[#allocation4 + $0x2] sm:$0xff]
          %v1022 = vld [vmem:[#allocation4 + $0xa] sm:$0xff]
          %v1023 = vld [vmem:[#allocation5 + $0x2] sm:$0xff]
          %v1024 = vld [vmem:[#allocation5 + $0xa] sm:$0xff]
          %v1025 = vstv %s1019
          %v1026 = vmul.f32 %v1025, %v1021
          %v1027 = vmul.f32 %v1025, %v1022
          %v1028 = vadd.f32 %v976, %v1026
          %v1029 = vadd.f32 %v977, %v1027
          %v1030 = vstv %s1020
          %v1031 = vmul.f32 %v1030, %v1023
          %v1032 = vmul.f32 %v1030, %v1024
          %v1033 = vadd.f32 %v989, %v1031
          %v1034 = vadd.f32 %v990, %v1032
          %s1035 = sld [smem:[#allocation10 + $0xf]]
          %s1036 = sld [smem:[#allocation10 + $0x40]]
          %v1037 = vstv %s1035
          %v1038 = vmul.f32 %v1037, %v1021
          %v1039 = vmul.f32 %v1037, %v1022
          %v1040 = vadd.f32 %v1004, %v1038
          %v1041 = vadd.f32 %v1005, %v1039
          %v1042 = vstv %s1036
          %v1043 = vmul.f32 %v1042, %v1023
          %v1044 = vmul.f32 %v1042, %v1024
          %v1045 = vadd.f32 %v1017, %v1043
          %v1046 = vadd.f32 %v1018, %v1044
          %s1047 = sld [smem:[#allocation10 + $0x10]]
          %s1048 = sld [smem:[#allocation10 + $0x41]]
          %v1049 = vstv %s1047
          %v1050 = vmul.f32 %v1049, %v1021
          %v1051 = vmul.f32 %v1049, %v1022
          %1054 = vrot.lane.b32.xlu0 %v1050, 126
          %v1055 = vpop.permute.xlu0 %1054
          %1056 = vrot.lane.b32.xlu0 %v1051, 126
          %v1057 = vpop.permute.xlu0 %1056
          %v1060 = vadd.f32 %v1028, %v1055
          %v1061 = vadd.f32 %v1029, %v1057
          %v1062 = vstv %s1048
          %v1063 = vmul.f32 %v1062, %v1023
          %v1064 = vmul.f32 %v1062, %v1024
          %1067 = vrot.lane.b32.xlu0 %v1063, 126
          %v1068 = vpop.permute.xlu0 %1067
          %1069 = vrot.lane.b32.xlu0 %v1064, 126
          %v1070 = vpop.permute.xlu0 %1069
          %v1073 = vadd.f32 %v1033, %v1068
          %v1074 = vadd.f32 %v1034, %v1070
          %s1075 = sld [smem:[#allocation10 + $0x11]]
          %s1076 = sld [smem:[#allocation10 + $0x42]]
          %v1077 = vstv %s1075
          %v1078 = vmul.f32 %v1077, %v1021
          %v1079 = vmul.f32 %v1077, %v1022
          %1082 = vrot.lane.b32.xlu0 %v1078, 126
          %v1083 = vpop.permute.xlu0 %1082
          %1084 = vrot.lane.b32.xlu0 %v1079, 126
          %v1085 = vpop.permute.xlu0 %1084
          %v1088 = vadd.f32 %v1040, %v1083
          %v1089 = vadd.f32 %v1041, %v1085
          %v1090 = vstv %s1076
          %v1091 = vmul.f32 %v1090, %v1023
          %v1092 = vmul.f32 %v1090, %v1024
          %1095 = vrot.lane.b32.xlu0 %v1091, 126
          %v1096 = vpop.permute.xlu0 %1095
          %1097 = vrot.lane.b32.xlu0 %v1092, 126
          %v1098 = vpop.permute.xlu0 %1097
          %v1101 = vadd.f32 %v1045, %v1096
          %v1102 = vadd.f32 %v1046, %v1098
          %s1103 = sld [smem:[#allocation10 + $0x12]]
          %s1104 = sld [smem:[#allocation10 + $0x43]]
          %v1105 = vstv %s1103
          %v1106 = vmul.f32 %v1105, %v1021
          %v1107 = vmul.f32 %v1105, %v1022
          %1110 = vrot.lane.b32.xlu0 %v1106, 124
          %v1111 = vpop.permute.xlu0 %1110
          %1112 = vrot.lane.b32.xlu0 %v1107, 124
          %v1113 = vpop.permute.xlu0 %1112
          %v1116 = vadd.f32 %v1060, %v1111
          %v1117 = vadd.f32 %v1061, %v1113
          %v1118 = vstv %s1104
          %v1119 = vmul.f32 %v1118, %v1023
          %v1120 = vmul.f32 %v1118, %v1024
          %1123 = vrot.lane.b32.xlu0 %v1119, 124
          %v1124 = vpop.permute.xlu0 %1123
          %1125 = vrot.lane.b32.xlu0 %v1120, 124
          %v1126 = vpop.permute.xlu0 %1125
          %v1129 = vadd.f32 %v1073, %v1124
          %v1130 = vadd.f32 %v1074, %v1126
          %s1131 = sld [smem:[#allocation10 + $0x13]]
          %s1132 = sld [smem:[#allocation10 + $0x44]]
          %v1133 = vstv %s1131
          %v1134 = vmul.f32 %v1133, %v1021
          %v1135 = vmul.f32 %v1133, %v1022
          %1138 = vrot.lane.b32.xlu0 %v1134, 124
          %v1139 = vpop.permute.xlu0 %1138
          %1140 = vrot.lane.b32.xlu0 %v1135, 124
          %v1141 = vpop.permute.xlu0 %1140
          %v1144 = vadd.f32 %v1088, %v1139
          %v1145 = vadd.f32 %v1089, %v1141
          %v1146 = vstv %s1132
          %v1147 = vmul.f32 %v1146, %v1023
          %v1148 = vmul.f32 %v1146, %v1024
          %1151 = vrot.lane.b32.xlu0 %v1147, 124
          %v1152 = vpop.permute.xlu0 %1151
          %1153 = vrot.lane.b32.xlu0 %v1148, 124
          %v1154 = vpop.permute.xlu0 %1153
          %v1157 = vadd.f32 %v1101, %v1152
          %v1158 = vadd.f32 %v1102, %v1154
          %s1159 = sld [smem:[#allocation10 + $0x14]]
          %s1160 = sld [smem:[#allocation10 + $0x45]]
          %v1161 = vstv %s1159
          %v1162 = vmul.f32 %v1161, %v1021
          %v1163 = vmul.f32 %v1161, %v1022
          %1166 = vrot.lane.b32.xlu0 %v1162, 122
          %v1167 = vpop.permute.xlu0 %1166
          %1168 = vrot.lane.b32.xlu0 %v1163, 122
          %v1169 = vpop.permute.xlu0 %1168
          %v1172 = vadd.f32 %v1116, %v1167
          %v1173 = vadd.f32 %v1117, %v1169
          %v1174 = vstv %s1160
          %v1175 = vmul.f32 %v1174, %v1023
          %v1176 = vmul.f32 %v1174, %v1024
          %1179 = vrot.lane.b32.xlu0 %v1175, 122
          %v1180 = vpop.permute.xlu0 %1179
          %1181 = vrot.lane.b32.xlu0 %v1176, 122
          %v1182 = vpop.permute.xlu0 %1181
          %v1185 = vadd.f32 %v1129, %v1180
          %v1186 = vadd.f32 %v1130, %v1182
          %s1187 = sld [smem:[#allocation10 + $0x15]]
          %s1188 = sld [smem:[#allocation10 + $0x46]]
          %v1189 = vld [vmem:[#allocation4 + $0x3] sm:$0xff]
          %v1190 = vld [vmem:[#allocation4 + $0xb] sm:$0xff]
          %v1191 = vld [vmem:[#allocation5 + $0x3] sm:$0xff]
          %v1192 = vld [vmem:[#allocation5 + $0xb] sm:$0xff]
          %v1193 = vstv %s1187
          %v1194 = vmul.f32 %v1193, %v1189
          %v1195 = vmul.f32 %v1193, %v1190
          %1198 = vrot.lane.b32.xlu0 %v1194, 1
          %v1199 = vpop.permute.xlu0 %1198
          %1200 = vrot.lane.b32.xlu0 %v1195, 1
          %v1201 = vpop.permute.xlu0 %1200
          %v1204 = vadd.f32 %v1144, %v1199
          %v1205 = vadd.f32 %v1145, %v1201
          %v1206 = vstv %s1188
          %v1207 = vmul.f32 %v1206, %v1191
          %v1208 = vmul.f32 %v1206, %v1192
          %1211 = vrot.lane.b32.xlu0 %v1207, 1
          %v1212 = vpop.permute.xlu0 %1211
          %1213 = vrot.lane.b32.xlu0 %v1208, 1
          %v1214 = vpop.permute.xlu0 %1213
          %v1217 = vadd.f32 %v1157, %v1212
          %v1218 = vadd.f32 %v1158, %v1214
          %s1219 = sld [smem:[#allocation10 + $0x16]]
          %s1220 = sld [smem:[#allocation10 + $0x47]]
          %v1221 = vstv %s1219
          %v1222 = vmul.f32 %v1221, %v1189
          %v1223 = vmul.f32 %v1221, %v1190
          %1226 = vrot.lane.b32.xlu0 %v1222, 127
          %v1227 = vpop.permute.xlu0 %1226
          %1228 = vrot.lane.b32.xlu0 %v1223, 127
          %v1229 = vpop.permute.xlu0 %1228
          %v1232 = vadd.f32 %v1172, %v1227
          %v1233 = vadd.f32 %v1173, %v1229
          %v1234 = vstv %s1220
          %v1235 = vmul.f32 %v1234, %v1191
          %v1236 = vmul.f32 %v1234, %v1192
          %1239 = vrot.lane.b32.xlu0 %v1235, 127
          %v1240 = vpop.permute.xlu0 %1239
          %1241 = vrot.lane.b32.xlu0 %v1236, 127
          %v1242 = vpop.permute.xlu0 %1241
          %v1245 = vadd.f32 %v1185, %v1240
          %v1246 = vadd.f32 %v1186, %v1242
          %s1247 = sld [smem:[#allocation10 + $0x17]]
          %s1248 = sld [smem:[#allocation10 + $0x48]]
          %v1249 = vstv %s1247
          %v1250 = vmul.f32 %v1249, %v1189
          %v1251 = vmul.f32 %v1249, %v1190
          %1254 = vrot.lane.b32.xlu0 %v1250, 127
          %v1255 = vpop.permute.xlu0 %1254
          %1256 = vrot.lane.b32.xlu0 %v1251, 127
          %v1257 = vpop.permute.xlu0 %1256
          %v1260 = vadd.f32 %v1204, %v1255
          %v1261 = vadd.f32 %v1205, %v1257
          %v1262 = vstv %s1248
          %v1263 = vmul.f32 %v1262, %v1191
          %v1264 = vmul.f32 %v1262, %v1192
          %1267 = vrot.lane.b32.xlu0 %v1263, 127
          %v1268 = vpop.permute.xlu0 %1267
          %1269 = vrot.lane.b32.xlu0 %v1264, 127
          %v1270 = vpop.permute.xlu0 %1269
          %v1273 = vadd.f32 %v1217, %v1268
          %v1274 = vadd.f32 %v1218, %v1270
          %s1275 = sld [smem:[#allocation10 + $0x18]]
          %s1276 = sld [smem:[#allocation10 + $0x49]]
          %v1277 = vstv %s1275
          %v1278 = vmul.f32 %v1277, %v1189
          %v1279 = vmul.f32 %v1277, %v1190
          %1282 = vrot.lane.b32.xlu0 %v1278, 125
          %v1283 = vpop.permute.xlu0 %1282
          %1284 = vrot.lane.b32.xlu0 %v1279, 125
          %v1285 = vpop.permute.xlu0 %1284
          %v1288 = vadd.f32 %v1232, %v1283
          %v1289 = vadd.f32 %v1233, %v1285
          %v1290 = vstv %s1276
          %v1291 = vmul.f32 %v1290, %v1191
          %v1292 = vmul.f32 %v1290, %v1192
          %1295 = vrot.lane.b32.xlu0 %v1291, 125
          %v1296 = vpop.permute.xlu0 %1295
          %1297 = vrot.lane.b32.xlu0 %v1292, 125
          %v1298 = vpop.permute.xlu0 %1297
          %v1301 = vadd.f32 %v1245, %v1296
          %v1302 = vadd.f32 %v1246, %v1298
          %s1303 = sld [smem:[#allocation10 + $0x19]]
          %s1304 = sld [smem:[#allocation10 + $0x4a]]
          %v1305 = vstv %s1303
          %v1306 = vmul.f32 %v1305, %v1189
          %v1307 = vmul.f32 %v1305, %v1190
          %1310 = vrot.lane.b32.xlu0 %v1306, 125
          %v1311 = vpop.permute.xlu0 %1310
          %1312 = vrot.lane.b32.xlu0 %v1307, 125
          %v1313 = vpop.permute.xlu0 %1312
          %v1316 = vadd.f32 %v1260, %v1311
          %v1317 = vadd.f32 %v1261, %v1313
          %v1318 = vstv %s1304
          %v1319 = vmul.f32 %v1318, %v1191
          %v1320 = vmul.f32 %v1318, %v1192
          %1323 = vrot.lane.b32.xlu0 %v1319, 125
          %v1324 = vpop.permute.xlu0 %1323
          %1325 = vrot.lane.b32.xlu0 %v1320, 125
          %v1326 = vpop.permute.xlu0 %1325
          %v1329 = vadd.f32 %v1273, %v1324
          %v1330 = vadd.f32 %v1274, %v1326
          %s1331 = sld [smem:[#allocation10 + $0x1a]]
          %s1332 = sld [smem:[#allocation10 + $0x4b]]
          %v1333 = vstv %s1331
          %v1334 = vmul.f32 %v1333, %v1189
          %v1335 = vmul.f32 %v1333, %v1190
          %1338 = vrot.lane.b32.xlu0 %v1334, 123
          %v1339 = vpop.permute.xlu0 %1338
          %1340 = vrot.lane.b32.xlu0 %v1335, 123
          %v1341 = vpop.permute.xlu0 %1340
          %v1344 = vadd.f32 %v1288, %v1339
          %v1345 = vadd.f32 %v1289, %v1341
          %v1346 = vstv %s1332
          %v1347 = vmul.f32 %v1346, %v1191
          %v1348 = vmul.f32 %v1346, %v1192
          %1351 = vrot.lane.b32.xlu0 %v1347, 123
          %v1352 = vpop.permute.xlu0 %1351
          %1353 = vrot.lane.b32.xlu0 %v1348, 123
          %v1354 = vpop.permute.xlu0 %1353
          %v1357 = vadd.f32 %v1301, %v1352
          %v1358 = vadd.f32 %v1302, %v1354
          %s1359 = sld [smem:[#allocation10 + $0x1b]]
          %s1360 = sld [smem:[#allocation10 + $0x4c]]
          %v1361 = vstv %s1359
          %v1362 = vmul.f32 %v1361, %v1189
          %v1363 = vmul.f32 %v1361, %v1190
          %1366 = vrot.lane.b32.xlu0 %v1362, 123
          %v1367 = vpop.permute.xlu0 %1366
          %1368 = vrot.lane.b32.xlu0 %v1363, 123
          %v1369 = vpop.permute.xlu0 %1368
          %v1372 = vadd.f32 %v1316, %v1367
          %v1373 = vadd.f32 %v1317, %v1369
          %v1374 = vstv %s1360
          %v1375 = vmul.f32 %v1374, %v1191
          %v1376 = vmul.f32 %v1374, %v1192
          %1379 = vrot.lane.b32.xlu0 %v1375, 123
          %v1380 = vpop.permute.xlu0 %1379
          %1381 = vrot.lane.b32.xlu0 %v1376, 123
          %v1382 = vpop.permute.xlu0 %1381
          %v1385 = vadd.f32 %v1329, %v1380
          %v1386 = vadd.f32 %v1330, %v1382
          %s1387 = sld [smem:[#allocation10 + $0x1c]]
          %s1388 = sld [smem:[#allocation10 + $0x4d]]
          %v1389 = vld [vmem:[#allocation4 + $0x4] sm:$0xff]
          %v1390 = vld [vmem:[#allocation4 + $0xc] sm:$0xff]
          %v1391 = vld [vmem:[#allocation5 + $0x4] sm:$0xff]
          %v1392 = vld [vmem:[#allocation5 + $0xc] sm:$0xff]
          %v1393 = vstv %s1387
          %v1394 = vmul.f32 %v1393, %v1389
          %v1395 = vmul.f32 %v1393, %v1390
          %v1396 = vadd.f32 %v1344, %v1394
          %v1397 = vadd.f32 %v1345, %v1395
          %v1398 = vstv %s1388
          %v1399 = vmul.f32 %v1398, %v1391
          %v1400 = vmul.f32 %v1398, %v1392
          %v1401 = vadd.f32 %v1357, %v1399
          %v1402 = vadd.f32 %v1358, %v1400
          %s1403 = sld [smem:[#allocation10 + $0x1d]]
          %s1404 = sld [smem:[#allocation10 + $0x4e]]
          %v1405 = vstv %s1403
          %v1406 = vmul.f32 %v1405, %v1389
          %v1407 = vmul.f32 %v1405, %v1390
          %v1408 = vadd.f32 %v1372, %v1406
          %v1409 = vadd.f32 %v1373, %v1407
          %v1410 = vstv %s1404
          %v1411 = vmul.f32 %v1410, %v1391
          %v1412 = vmul.f32 %v1410, %v1392
          %v1413 = vadd.f32 %v1385, %v1411
          %v1414 = vadd.f32 %v1386, %v1412
          %s1415 = sld [smem:[#allocation10 + $0x1e]]
          %s1416 = sld [smem:[#allocation10 + $0x4f]]
          %v1417 = vstv %s1415
          %v1418 = vmul.f32 %v1417, %v1389
          %v1419 = vmul.f32 %v1417, %v1390
          %1422 = vrot.lane.b32.xlu0 %v1418, 126
          %v1423 = vpop.permute.xlu0 %1422
          %1424 = vrot.lane.b32.xlu0 %v1419, 126
          %v1425 = vpop.permute.xlu0 %1424
          %v1428 = vadd.f32 %v1396, %v1423
          %v1429 = vadd.f32 %v1397, %v1425
          %v1430 = vstv %s1416
          %v1431 = vmul.f32 %v1430, %v1391
          %v1432 = vmul.f32 %v1430, %v1392
          %1435 = vrot.lane.b32.xlu0 %v1431, 126
          %v1436 = vpop.permute.xlu0 %1435
          %1437 = vrot.lane.b32.xlu0 %v1432, 126
          %v1438 = vpop.permute.xlu0 %1437
          %v1441 = vadd.f32 %v1401, %v1436
          %v1442 = vadd.f32 %v1402, %v1438
          %s1443 = sld [smem:[#allocation10 + $0x1f]]
          %s1444 = sld [smem:[#allocation10 + $0x50]]
          %v1445 = vstv %s1443
          %v1446 = vmul.f32 %v1445, %v1389
          %v1447 = vmul.f32 %v1445, %v1390
          %1450 = vrot.lane.b32.xlu0 %v1446, 126
          %v1451 = vpop.permute.xlu0 %1450
          %1452 = vrot.lane.b32.xlu0 %v1447, 126
          %v1453 = vpop.permute.xlu0 %1452
          %v1456 = vadd.f32 %v1408, %v1451
          %v1457 = vadd.f32 %v1409, %v1453
          %v1458 = vstv %s1444
          %v1459 = vmul.f32 %v1458, %v1391
          %v1460 = vmul.f32 %v1458, %v1392
          %1463 = vrot.lane.b32.xlu0 %v1459, 126
          %v1464 = vpop.permute.xlu0 %1463
          %1465 = vrot.lane.b32.xlu0 %v1460, 126
          %v1466 = vpop.permute.xlu0 %1465
          %v1469 = vadd.f32 %v1413, %v1464
          %v1470 = vadd.f32 %v1414, %v1466
          %s1471 = sld [smem:[#allocation10 + $0x20]]
          %s1472 = sld [smem:[#allocation10 + $0x51]]
          %v1473 = vstv %s1471
          %v1474 = vmul.f32 %v1473, %v1389
          %v1475 = vmul.f32 %v1473, %v1390
          %1478 = vrot.lane.b32.xlu0 %v1474, 124
          %v1479 = vpop.permute.xlu0 %1478
          %1480 = vrot.lane.b32.xlu0 %v1475, 124
          %v1481 = vpop.permute.xlu0 %1480
          %v1484 = vadd.f32 %v1428, %v1479
          %v1485 = vadd.f32 %v1429, %v1481
          %v1486 = vstv %s1472
          %v1487 = vmul.f32 %v1486, %v1391
          %v1488 = vmul.f32 %v1486, %v1392
          %1491 = vrot.lane.b32.xlu0 %v1487, 124
          %v1492 = vpop.permute.xlu0 %1491
          %1493 = vrot.lane.b32.xlu0 %v1488, 124
          %v1494 = vpop.permute.xlu0 %1493
          %v1497 = vadd.f32 %v1441, %v1492
          %v1498 = vadd.f32 %v1442, %v1494
          %s1499 = sld [smem:[#allocation10 + $0x21]]
          %s1500 = sld [smem:[#allocation10 + $0x52]]
          %v1501 = vstv %s1499
          %v1502 = vmul.f32 %v1501, %v1389
          %v1503 = vmul.f32 %v1501, %v1390
          %1506 = vrot.lane.b32.xlu0 %v1502, 124
          %v1507 = vpop.permute.xlu0 %1506
          %1508 = vrot.lane.b32.xlu0 %v1503, 124
          %v1509 = vpop.permute.xlu0 %1508
          %v1512 = vadd.f32 %v1456, %v1507
          %v1513 = vadd.f32 %v1457, %v1509
          %v1514 = vstv %s1500
          %v1515 = vmul.f32 %v1514, %v1391
          %v1516 = vmul.f32 %v1514, %v1392
          %1519 = vrot.lane.b32.xlu0 %v1515, 124
          %v1520 = vpop.permute.xlu0 %1519
          %1521 = vrot.lane.b32.xlu0 %v1516, 124
          %v1522 = vpop.permute.xlu0 %1521
          %v1525 = vadd.f32 %v1469, %v1520
          %v1526 = vadd.f32 %v1470, %v1522
          %s1527 = sld [smem:[#allocation10 + $0x22]]
          %s1528 = sld [smem:[#allocation10 + $0x53]]
          %v1529 = vstv %s1527
          %v1530 = vmul.f32 %v1529, %v1389
          %v1531 = vmul.f32 %v1529, %v1390
          %1534 = vrot.lane.b32.xlu0 %v1530, 122
          %v1535 = vpop.permute.xlu0 %1534
          %1536 = vrot.lane.b32.xlu0 %v1531, 122
          %v1537 = vpop.permute.xlu0 %1536
          %v1540 = vadd.f32 %v1484, %v1535
          %v1541 = vadd.f32 %v1485, %v1537
          %v1542 = vstv %s1528
          %v1543 = vmul.f32 %v1542, %v1391
          %v1544 = vmul.f32 %v1542, %v1392
          %1547 = vrot.lane.b32.xlu0 %v1543, 122
          %v1548 = vpop.permute.xlu0 %1547
          %1549 = vrot.lane.b32.xlu0 %v1544, 122
          %v1550 = vpop.permute.xlu0 %1549
          %v1553 = vadd.f32 %v1497, %v1548
          %v1554 = vadd.f32 %v1498, %v1550
          %s1555 = sld [smem:[#allocation10 + $0x23]]
          %s1556 = sld [smem:[#allocation10 + $0x54]]
          %v1557 = vld [vmem:[#allocation4 + $0x5] sm:$0xff]
          %v1558 = vld [vmem:[#allocation4 + $0xd] sm:$0xff]
          %v1559 = vld [vmem:[#allocation5 + $0x5] sm:$0xff]
          %v1560 = vld [vmem:[#allocation5 + $0xd] sm:$0xff]
          %v1561 = vstv %s1555
          %v1562 = vmul.f32 %v1561, %v1557
          %v1563 = vmul.f32 %v1561, %v1558
          %1566 = vrot.lane.b32.xlu0 %v1562, 1
          %v1567 = vpop.permute.xlu0 %1566
          %1568 = vrot.lane.b32.xlu0 %v1563, 1
          %v1569 = vpop.permute.xlu0 %1568
          %v1572 = vadd.f32 %v1512, %v1567
          %v1573 = vadd.f32 %v1513, %v1569
          %v1574 = vstv %s1556
          %v1575 = vmul.f32 %v1574, %v1559
          %v1576 = vmul.f32 %v1574, %v1560
          %1579 = vrot.lane.b32.xlu0 %v1575, 1
          %v1580 = vpop.permute.xlu0 %1579
          %1581 = vrot.lane.b32.xlu0 %v1576, 1
          %v1582 = vpop.permute.xlu0 %1581
          %v1585 = vadd.f32 %v1525, %v1580
          %v1586 = vadd.f32 %v1526, %v1582
          %s1587 = sld [smem:[#allocation10 + $0x24]]
          %s1588 = sld [smem:[#allocation10 + $0x55]]
          %v1589 = vstv %s1587
          %v1590 = vmul.f32 %v1589, %v1557
          %v1591 = vmul.f32 %v1589, %v1558
          %1594 = vrot.lane.b32.xlu0 %v1590, 127
          %v1595 = vpop.permute.xlu0 %1594
          %1596 = vrot.lane.b32.xlu0 %v1591, 127
          %v1597 = vpop.permute.xlu0 %1596
          %v1600 = vadd.f32 %v1540, %v1595
          %v1601 = vadd.f32 %v1541, %v1597
          %v1602 = vstv %s1588
          %v1603 = vmul.f32 %v1602, %v1559
          %v1604 = vmul.f32 %v1602, %v1560
          %1607 = vrot.lane.b32.xlu0 %v1603, 127
          %v1608 = vpop.permute.xlu0 %1607
          %1609 = vrot.lane.b32.xlu0 %v1604, 127
          %v1610 = vpop.permute.xlu0 %1609
          %v1613 = vadd.f32 %v1553, %v1608
          %v1614 = vadd.f32 %v1554, %v1610
          %s1615 = sld [smem:[#allocation10 + $0x25]]
          %s1616 = sld [smem:[#allocation10 + $0x56]]
          %v1617 = vstv %s1615
          %v1618 = vmul.f32 %v1617, %v1557
          %v1619 = vmul.f32 %v1617, %v1558
          %1622 = vrot.lane.b32.xlu0 %v1618, 127
          %v1623 = vpop.permute.xlu0 %1622
          %1624 = vrot.lane.b32.xlu0 %v1619, 127
          %v1625 = vpop.permute.xlu0 %1624
          %v1628 = vadd.f32 %v1572, %v1623
          %v1629 = vadd.f32 %v1573, %v1625
          %v1630 = vstv %s1616
          %v1631 = vmul.f32 %v1630, %v1559
          %v1632 = vmul.f32 %v1630, %v1560
          %1635 = vrot.lane.b32.xlu0 %v1631, 127
          %v1636 = vpop.permute.xlu0 %1635
          %1637 = vrot.lane.b32.xlu0 %v1632, 127
          %v1638 = vpop.permute.xlu0 %1637
          %v1641 = vadd.f32 %v1585, %v1636
          %v1642 = vadd.f32 %v1586, %v1638
          %s1643 = sld [smem:[#allocation10 + $0x26]]
          %s1644 = sld [smem:[#allocation10 + $0x57]]
          %v1645 = vstv %s1643
          %v1646 = vmul.f32 %v1645, %v1557
          %v1647 = vmul.f32 %v1645, %v1558
          %1650 = vrot.lane.b32.xlu0 %v1646, 125
          %v1651 = vpop.permute.xlu0 %1650
          %1652 = vrot.lane.b32.xlu0 %v1647, 125
          %v1653 = vpop.permute.xlu0 %1652
          %v1656 = vadd.f32 %v1600, %v1651
          %v1657 = vadd.f32 %v1601, %v1653
          %v1658 = vstv %s1644
          %v1659 = vmul.f32 %v1658, %v1559
          %v1660 = vmul.f32 %v1658, %v1560
          %1663 = vrot.lane.b32.xlu0 %v1659, 125
          %v1664 = vpop.permute.xlu0 %1663
          %1665 = vrot.lane.b32.xlu0 %v1660, 125
          %v1666 = vpop.permute.xlu0 %1665
          %v1669 = vadd.f32 %v1613, %v1664
          %v1670 = vadd.f32 %v1614, %v1666
          %s1671 = sld [smem:[#allocation10 + $0x27]]
          %s1672 = sld [smem:[#allocation10 + $0x58]]
          %v1673 = vstv %s1671
          %v1674 = vmul.f32 %v1673, %v1557
          %v1675 = vmul.f32 %v1673, %v1558
          %1678 = vrot.lane.b32.xlu0 %v1674, 125
          %v1679 = vpop.permute.xlu0 %1678
          %1680 = vrot.lane.b32.xlu0 %v1675, 125
          %v1681 = vpop.permute.xlu0 %1680
          %v1684 = vadd.f32 %v1628, %v1679
          %v1685 = vadd.f32 %v1629, %v1681
          %v1686 = vstv %s1672
          %v1687 = vmul.f32 %v1686, %v1559
          %v1688 = vmul.f32 %v1686, %v1560
          %1691 = vrot.lane.b32.xlu0 %v1687, 125
          %v1692 = vpop.permute.xlu0 %1691
          %1693 = vrot.lane.b32.xlu0 %v1688, 125
          %v1694 = vpop.permute.xlu0 %1693
          %v1697 = vadd.f32 %v1641, %v1692
          %v1698 = vadd.f32 %v1642, %v1694
          %s1699 = sld [smem:[#allocation10 + $0x28]]
          %s1700 = sld [smem:[#allocation10 + $0x59]]
          %v1701 = vstv %s1699
          %v1702 = vmul.f32 %v1701, %v1557
          %v1703 = vmul.f32 %v1701, %v1558
          %1706 = vrot.lane.b32.xlu0 %v1702, 123
          %v1707 = vpop.permute.xlu0 %1706
          %1708 = vrot.lane.b32.xlu0 %v1703, 123
          %v1709 = vpop.permute.xlu0 %1708
          %v1712 = vadd.f32 %v1656, %v1707
          %v1713 = vadd.f32 %v1657, %v1709
          %v1714 = vstv %s1700
          %v1715 = vmul.f32 %v1714, %v1559
          %v1716 = vmul.f32 %v1714, %v1560
          %1719 = vrot.lane.b32.xlu0 %v1715, 123
          %v1720 = vpop.permute.xlu0 %1719
          %1721 = vrot.lane.b32.xlu0 %v1716, 123
          %v1722 = vpop.permute.xlu0 %1721
          %v1725 = vadd.f32 %v1669, %v1720
          %v1726 = vadd.f32 %v1670, %v1722
          %s1727 = sld [smem:[#allocation10 + $0x29]]
          %s1728 = sld [smem:[#allocation10 + $0x5a]]
          %v1729 = vstv %s1727
          %v1730 = vmul.f32 %v1729, %v1557
          %v1731 = vmul.f32 %v1729, %v1558
          %1734 = vrot.lane.b32.xlu0 %v1730, 123
          %v1735 = vpop.permute.xlu0 %1734
          %1736 = vrot.lane.b32.xlu0 %v1731, 123
          %v1737 = vpop.permute.xlu0 %1736
          %v1740 = vadd.f32 %v1684, %v1735
          %v1741 = vadd.f32 %v1685, %v1737
          %v1742 = vstv %s1728
          %v1743 = vmul.f32 %v1742, %v1559
          %v1744 = vmul.f32 %v1742, %v1560
          %1747 = vrot.lane.b32.xlu0 %v1743, 123
          %v1748 = vpop.permute.xlu0 %1747
          %1749 = vrot.lane.b32.xlu0 %v1744, 123
          %v1750 = vpop.permute.xlu0 %1749
          %v1753 = vadd.f32 %v1697, %v1748
          %v1754 = vadd.f32 %v1698, %v1750
          %s1755 = sld [smem:[#allocation10 + $0x2a]]
          %s1756 = sld [smem:[#allocation10 + $0x5b]]
          %v1757 = vld [vmem:[#allocation4 + $0x6] sm:$0xff]
          %v1758 = vld [vmem:[#allocation4 + $0xe] sm:$0xff]
          %v1759 = vld [vmem:[#allocation5 + $0x6] sm:$0xff]
          %v1760 = vld [vmem:[#allocation5 + $0xe] sm:$0xff]
          %v1761 = vstv %s1755
          %v1762 = vmul.f32 %v1761, %v1757
          %v1763 = vmul.f32 %v1761, %v1758
          %v1764 = vadd.f32 %v1712, %v1762
          %v1765 = vadd.f32 %v1713, %v1763
          %v1766 = vstv %s1756
          %v1767 = vmul.f32 %v1766, %v1759
          %v1768 = vmul.f32 %v1766, %v1760
          %v1769 = vadd.f32 %v1725, %v1767
          %v1770 = vadd.f32 %v1726, %v1768
          %s1771 = sld [smem:[#allocation10 + $0x2b]]
          %s1772 = sld [smem:[#allocation10 + $0x5c]]
          %v1773 = vstv %s1771
          %v1774 = vmul.f32 %v1773, %v1757
          %v1775 = vmul.f32 %v1773, %v1758
          %v1776 = vadd.f32 %v1740, %v1774
          %v1777 = vadd.f32 %v1741, %v1775
          %v1778 = vstv %s1772
          %v1779 = vmul.f32 %v1778, %v1759
          %v1780 = vmul.f32 %v1778, %v1760
          %v1781 = vadd.f32 %v1753, %v1779
          %v1782 = vadd.f32 %v1754, %v1780
          %s1783 = sld [smem:[#allocation10 + $0x2c]]
          %s1784 = sld [smem:[#allocation10 + $0x5d]]
          %v1785 = vstv %s1783
          %v1786 = vmul.f32 %v1785, %v1757
          %v1787 = vmul.f32 %v1785, %v1758
          %1790 = vrot.lane.b32.xlu0 %v1786, 126
          %v1791 = vpop.permute.xlu0 %1790
          %1792 = vrot.lane.b32.xlu0 %v1787, 126
          %v1793 = vpop.permute.xlu0 %1792
          %v1796 = vadd.f32 %v1764, %v1791
          %v1797 = vadd.f32 %v1765, %v1793
          %v1798 = vstv %s1784
          %v1799 = vmul.f32 %v1798, %v1759
          %v1800 = vmul.f32 %v1798, %v1760
          %1803 = vrot.lane.b32.xlu0 %v1799, 126
          %v1804 = vpop.permute.xlu0 %1803
          %1805 = vrot.lane.b32.xlu0 %v1800, 126
          %v1806 = vpop.permute.xlu0 %1805
          %v1809 = vadd.f32 %v1769, %v1804
          %v1810 = vadd.f32 %v1770, %v1806
          %s1811 = sld [smem:[#allocation10 + $0x2d]]
          %s1812 = sld [smem:[#allocation10 + $0x5e]]
          %v1813 = vstv %s1811
          %v1814 = vmul.f32 %v1813, %v1757
          %v1815 = vmul.f32 %v1813, %v1758
          %1818 = vrot.lane.b32.xlu0 %v1814, 126
          %v1819 = vpop.permute.xlu0 %1818
          %1820 = vrot.lane.b32.xlu0 %v1815, 126
          %v1821 = vpop.permute.xlu0 %1820
          %v1824 = vadd.f32 %v1776, %v1819
          %v1825 = vadd.f32 %v1777, %v1821
          %v1826 = vstv %s1812
          %v1827 = vmul.f32 %v1826, %v1759
          %v1828 = vmul.f32 %v1826, %v1760
          %1831 = vrot.lane.b32.xlu0 %v1827, 126
          %v1832 = vpop.permute.xlu0 %1831
          %1833 = vrot.lane.b32.xlu0 %v1828, 126
          %v1834 = vpop.permute.xlu0 %1833
          %v1837 = vadd.f32 %v1781, %v1832
          %v1838 = vadd.f32 %v1782, %v1834
          %s1839 = sld [smem:[#allocation10 + $0x2e]]
          %s1840 = sld [smem:[#allocation10 + $0x5f]]
          %v1841 = vstv %s1839
          %v1842 = vmul.f32 %v1841, %v1757
          %v1843 = vmul.f32 %v1841, %v1758
          %1846 = vrot.lane.b32.xlu0 %v1842, 124
          %v1847 = vpop.permute.xlu0 %1846
          %1848 = vrot.lane.b32.xlu0 %v1843, 124
          %v1849 = vpop.permute.xlu0 %1848
          %v1852 = vadd.f32 %v1796, %v1847
          %v1853 = vadd.f32 %v1797, %v1849
          %v1854 = vstv %s1840
          %v1855 = vmul.f32 %v1854, %v1759
          %v1856 = vmul.f32 %v1854, %v1760
          %1859 = vrot.lane.b32.xlu0 %v1855, 124
          %v1860 = vpop.permute.xlu0 %1859
          %1861 = vrot.lane.b32.xlu0 %v1856, 124
          %v1862 = vpop.permute.xlu0 %1861
          %v1865 = vadd.f32 %v1809, %v1860
          %v1866 = vadd.f32 %v1810, %v1862
          %s1867 = sld [smem:[#allocation10 + $0x2f]]
          %s1868 = sld [smem:[#allocation10 + $0x60]]
          %v1869 = vstv %s1867
          %v1870 = vmul.f32 %v1869, %v1757
          %v1871 = vmul.f32 %v1869, %v1758
          %1874 = vrot.lane.b32.xlu0 %v1870, 124
          %v1875 = vpop.permute.xlu0 %1874
          %1876 = vrot.lane.b32.xlu0 %v1871, 124
          %v1877 = vpop.permute.xlu0 %1876
          %v1880 = vadd.f32 %v1824, %v1875
          %v1881 = vadd.f32 %v1825, %v1877
          %v1882 = vstv %s1868
          %v1883 = vmul.f32 %v1882, %v1759
          %v1884 = vmul.f32 %v1882, %v1760
          %1887 = vrot.lane.b32.xlu0 %v1883, 124
          %v1888 = vpop.permute.xlu0 %1887
          %1889 = vrot.lane.b32.xlu0 %v1884, 124
          %v1890 = vpop.permute.xlu0 %1889
          %v1893 = vadd.f32 %v1837, %v1888
          %v1894 = vadd.f32 %v1838, %v1890
          %s1895 = sld [smem:[#allocation10 + $0x30]]
          %s1896 = sld [smem:[#allocation10 + $0x61]]
          %v1897 = vstv %s1895
          %v1898 = vmul.f32 %v1897, %v1757
          %v1899 = vmul.f32 %v1897, %v1758
          %1902 = vrot.lane.b32.xlu0 %v1898, 122
          %v1903 = vpop.permute.xlu0 %1902
          %1904 = vrot.lane.b32.xlu0 %v1899, 122
          %v1905 = vpop.permute.xlu0 %1904
          %v1908 = vadd.f32 %v1852, %v1903
          %v1909 = vadd.f32 %v1853, %v1905
          %v1910 = vstv %s1896
          %v1911 = vmul.f32 %v1910, %v1759
          %v1912 = vmul.f32 %v1910, %v1760
          %1915 = vrot.lane.b32.xlu0 %v1911, 122
          %v1916 = vpop.permute.xlu0 %1915
          %1917 = vrot.lane.b32.xlu0 %v1912, 122
          %v1918 = vpop.permute.xlu0 %1917
          %v1921 = vadd.f32 %v1865, %v1916
          %v1922 = vadd.f32 %v1866, %v1918
          %v1923 = vadd.f32 %v1908, %v1921
          %v1924 = vadd.f32 %v1909, %v1922
          %v1925 = vadd.f32 %v1880, %v1893
          %v1926 = vadd.f32 %v1881, %v1894
          %1929 = vrot.lane.b32.xlu0 %v1925, 127
          %v1930 = vpop.permute.xlu0 %1929
          %1931 = vrot.lane.b32.xlu0 %v1926, 127
          %v1932 = vpop.permute.xlu0 %1931
          %v1935 = vadd.f32 %v1923, %v1930
          %v1936 = vadd.f32 %v1924, %v1932
          %v1937 = vxor.u32 %v1935, 2147483648
          %v1938 = vxor.u32 %v1936, 2147483648
          %v1939 = vmul.f32 %v1937, 1.442695
          %v1940 = vpow.pop %v1939
          %v1941 = vmul.f32 %v1938, 1.442695
          %v1942 = vpow.pop %v1941
          %v1943 = vadd.f32 %v1940, 1.0
          %v1944 = vadd.f32 %v1942, 1.0
          %v1945 = vrcp.pop %v1943
          %v1946 = vmul.f32 1.0, %v1945
          %v1947 = vrcp.pop %v1944
          %v1948 = vmul.f32 1.0, %v1947
          %vm1949 = vcmask 130048
          %1950 = vst.msk [vmem:[%s189] sm:$0xff] %vm1949, %v1946
          %1951 = vst.msk [vmem:[%s189 + $0x8] sm:$0xff] %vm1949, %v1948
        $region48: #{tpu_custom_call.1} parent=27 // pred_fallthru
          _
        %s1952 = sand.u32 %s89, 1
        %s1953 = scalar_lea.sflag [#allocation8], %s1952
        %s1954 = sand.u32 %s89, 1
        %s1955 = smul.addr %s1954, 16
        %s1956 = scalar_lea.vmem [#allocation11], %s1955
        // Predicated region
        $region49: #{tpu_custom_call.1} parent=27 // pred_check
          %p1957 = pneg %p99
        $region50: #{tpu_custom_call.1} parent=27 // pred_check_branch
          %1959 = sbr.rel (%p1957) target = $region52
        $region51: #{tpu_custom_call.1} parent=27 // pred_region
          %s1961 = ssub.s32 256, 256
          %1962 = vsyncadd %s1953, %s1961
          %s1963 = smul.addr %s24, 2
          %s1964 = smul.addr %s1963, 128
          %s1965 = scalar_lea.hbm %s2, %s1964
          %s1966 = sshll.u32 %s1956, 4
          %s1967 = int_to_ptr.vmem [resolvable:$true] %s1966
          %1972 = dma.vmem_to_hbm [thread:$0]  %s1967, 256, %s1965, %s1953, 128, 128, 8
        $region52: #{tpu_custom_call.1} parent=27 // pred_fallthru
          _
      $region28: #{tpu_custom_call.1} parent=5 // pred_fallthru
        _
      %p1973 = scmp.le.s32.totalorder 2, %s15
      // Predicated region
      $region53: #{tpu_custom_call.1} parent=5 // pred_check
        %p1974 = pneg %p1973
      $region54: #{tpu_custom_call.1} parent=5 // pred_check_branch
        %1976 = sbr.rel (%p1974) target = $region56
      $region55: #{tpu_custom_call.1} parent=5 // pred_region
        %s1977 = ssub.s32 %s15, 2
        // Predicated region
        $region57: #{tpu_custom_call.1} parent=55 // pred_check
          %p1978 = pneg %p105
        $region58: #{tpu_custom_call.1} parent=55 // pred_check_branch
          %1980 = sbr.rel (%p1978) target = $region60
        $region59: #{tpu_custom_call.1} parent=55 // pred_region
          %s1981 = sand.u32 %s90, 1
          %s1982 = scalar_lea.sflag [#allocation8], %s1981
          %s1983 = sand.u32 %s90, 1
          %s1984 = smul.addr %s1983, 16
          %s1985 = scalar_lea.vmem [#allocation11], %s1984
          %1986 = dma.done %s1982, 256
        $region60: #{tpu_custom_call.1} parent=55 // pred_fallthru
          _
      $region56: #{tpu_custom_call.1} parent=5 // pred_fallthru
        _
    $region6: #{tpu_custom_call.1} parent=1 // loop_footer
      %s19 = sadd.s32 1, %s15
    $region7: #{tpu_custom_call.1} parent=1 // loop_footer_branch
      %14 = sbr.rel target = $region3
    $region8: #{tpu_custom_call.1} parent=1 // loop_exit
      _
    %1987 = vsyncpa [#allocation7], 1
    %s1988 = scalar_lea.sflag [#allocation7], 1
    %1989 = vsyncpa %s1988, 1
    %1990 = vsyncpa [#allocation8], 1
    %s1991 = scalar_lea.sflag [#allocation8], 1
    %1992 = vsyncpa %s1991, 1
    %1993 = vsyncpa [#allocation9], 1
    %s1994 = scalar_lea.sflag [#allocation9], 1
    %1995 = vsyncpa %s1994, 1

</llo_original>
